<compile_context>
chip_gen: v7x
topology: tpu7x:2x2x1
jax: 0.10.0
libtpu: 0.0.40
codegen_flags: <defaults>
</compile_context>

<pallas_src>
import math

import jax
import jax.numpy as jnp
from jax.experimental import pallas as pl
from jax.experimental.pallas import tpu as pltpu

# ----- model config (small, consistent with the module's __init__) -----
IN_FEATURES = 16
HIDDEN = 32          # hidden_channels == out_channels of each MLA layer
OUT_FEATURES = 4
NUM_NODES = 8
NUM_HEADS = 4
KV_COMP = 8          # kv_compression_dim
Q_COMP = 8           # q_compression_dim
NUM_LAYERS = 2
HEAD_DIM = HIDDEN // NUM_HEADS
EPS = 1e-5           # nn.LayerNorm default eps
QKV = Q_COMP + KV_COMP

# ----- packed-slab layout (static row/col offsets, all compile-time) -----
SLAB_W = 64          # lane width of both slabs (max needed: W_uk|W_uv = 64)

# weight slab rows (f32, [W_ROWS, SLAB_W]); each block starts at a multiple of 8
R_RES   = 0          # res_proj            [IN_FEATURES, HIDDEN]
R_DQKV0 = 16         # W_dq|W_dkv layer 0  [IN_FEATURES, QKV]
R_UQ0   = 32         # W_uq (scaled) l0    [Q_COMP, HIDDEN]
R_UKV0  = 40         # W_uk|W_uv l0        [KV_COMP, 2*HIDDEN]
R_WO0   = 48         # W_o l0              [HIDDEN, HIDDEN]
R_DQKV1 = 80         # W_dq|W_dkv layer 1  [HIDDEN, QKV]
R_UQ1   = 112        # W_uq (scaled) l1    [Q_COMP, HIDDEN]
R_UKV1  = 120        # W_uk|W_uv l1        [KV_COMP, 2*HIDDEN]
R_WO1   = 128        # W_o l1              [HIDDEN, HIDDEN]
R_OUT   = 160        # W_out               [HIDDEN, OUT_FEATURES]
W_ROWS  = 192

LAYER_W_ROWS = [
    (R_DQKV0, R_UQ0, R_UKV0, R_WO0, IN_FEATURES),
    (R_DQKV1, R_UQ1, R_UKV1, R_WO1, HIDDEN),
]

# bias / LayerNorm slab rows (f32, [B_ROWS, SLAB_W]); 6 rows per layer + 1 out
# per layer l (base = 6*l): 0 b_dq|b_dkv, 1 b_uq(scaled), 2 b_uk|b_uv,
#                           3 b_o, 4 gamma, 5 beta
B_OUT_ROW = 6 * NUM_LAYERS
B_ROWS = 16


def _gnn_mla_kernel(x_ref, w_ref, b_ref, out_ref):
    f32 = jnp.float32
    bf16 = jnp.bfloat16

    def dot_bf16(a, b):
        # bf16 operands for the MXU, f32 accumulation; elementwise stays f32.
        return jnp.dot(a.astype(bf16), b.astype(bf16), preferred_element_type=f32)

    x = x_ref[...].astype(f32)                       # [N, IN_FEATURES]

    for layer in range(NUM_LAYERS):
        r_dqkv, r_uq, r_ukv, r_wo, cur = LAYER_W_ROWS[layer]
        brow = 6 * layer

        # residual (projected only for the first layer, as in the reference)
        if layer == 0 and IN_FEATURES != HIDDEN:
            residual = dot_bf16(x, w_ref[R_RES:R_RES + IN_FEATURES, 0:HIDDEN])
        else:
            residual = x

        # --- MLA: fused compress, then fused expand ---
        # one x-projection for both latents: [N, cur] @ [cur, Q_COMP+KV_COMP]
        lat = dot_bf16(x, w_ref[r_dqkv:r_dqkv + cur, 0:QKV]) \
            + b_ref[brow:brow + 1, 0:QKV]
        q_lat = lat[:, 0:Q_COMP]
        kv_lat = lat[:, Q_COMP:QKV]

        # q expansion (1/sqrt(head_dim) already folded into W_uq / b_uq)
        q = dot_bf16(q_lat, w_ref[r_uq:r_uq + Q_COMP, 0:HIDDEN]) \
            + b_ref[brow + 1:brow + 2, 0:HIDDEN]                  # [N, HIDDEN]
        # fused k|v expansion: [N, KV_COMP] @ [KV_COMP, 2*HIDDEN]
        kv = dot_bf16(kv_lat, w_ref[r_ukv:r_ukv + KV_COMP, 0:2 * HIDDEN]) \
            + b_ref[brow + 2:brow + 3, 0:2 * HIDDEN]
        k = kv[:, 0:HIDDEN]
        v = kv[:, HIDDEN:2 * HIDDEN]

        # one transpose per layer (instead of one per head)
        kT = k.T                                                  # [HIDDEN, N]
        qb = q.astype(bf16)
        kTb = kT.astype(bf16)
        vb = v.astype(bf16)

        # per-head attention; output projection accumulated from sublane
        # slices of W_o (no jnp.concatenate).
        # TODO(synk): MultiHeadLatentAttentionLayer source not provided; full
        # dense attention over all nodes is used (edge_index mask omitted).
        y = None
        for h in range(NUM_HEADS):
            c0 = h * HEAD_DIM
            s = jnp.dot(qb[:, c0:c0 + HEAD_DIM], kTb[c0:c0 + HEAD_DIM, :],
                        preferred_element_type=f32)               # [N, N]
            s = s - jnp.max(s, axis=-1, keepdims=True)
            e = jnp.exp(s)
            a = e * pl.reciprocal(jnp.sum(e, axis=-1, keepdims=True), approx=True)
            ho = jnp.dot(a.astype(bf16), vb[:, c0:c0 + HEAD_DIM],
                         preferred_element_type=f32)              # [N, HEAD_DIM]
            part = dot_bf16(ho, w_ref[r_wo + c0:r_wo + c0 + HEAD_DIM, 0:HIDDEN])
            y = part if y is None else y + part                   # [N, HIDDEN]

        z = y + b_ref[brow + 3:brow + 4, 0:HIDDEN] + residual

        # single-pass LayerNorm + ReLU (dropout p=0 -> identity)
        mean = jnp.mean(z, axis=-1, keepdims=True)
        mean_sq = jnp.mean(z * z, axis=-1, keepdims=True)
        var = mean_sq - mean * mean
        zn = (z - mean) * jax.lax.rsqrt(var + EPS)
        gamma = b_ref[brow + 4:brow + 5, 0:HIDDEN]
        beta = b_ref[brow + 5:brow + 6, 0:HIDDEN]
        x = jnp.maximum(zn * gamma + beta, 0.0)

    # output Linear + log_softmax(dim=1)
    logits = dot_bf16(x, w_ref[R_OUT:R_OUT + HIDDEN, 0:OUT_FEATURES]) \
        + b_ref[B_OUT_ROW:B_OUT_ROW + 1, 0:OUT_FEATURES]          # [N, OUT]
    m = jnp.max(logits, axis=-1, keepdims=True)
    lse = jnp.log(jnp.sum(jnp.exp(logits - m), axis=-1, keepdims=True)) + m
    out_ref[...] = (logits - lse).astype(out_ref.dtype)


# --------------------- host-side parameter init & packing ---------------------

def init_params(key):
    """Deterministic parameter init (xavier-uniform weights, uniform biases)."""
    def xavier(k, shape):
        fan_in, fan_out = shape
        a = math.sqrt(6.0 / (fan_in + fan_out))
        return jax.random.uniform(k, shape, jnp.float32, -a, a)

    def bias(k, fan_in, dim):
        b = 1.0 / math.sqrt(fan_in)
        return jax.random.uniform(k, (dim,), jnp.float32, -b, b)

    keys = iter(jax.random.split(key, 64))
    p = {"res": xavier(next(keys), (IN_FEATURES, HIDDEN))}   # stored as [in, out]
    cur = IN_FEATURES
    for l in range(NUM_LAYERS):
        p[f"w_dq{l}"] = xavier(next(keys), (cur, Q_COMP))
        p[f"b_dq{l}"] = bias(next(keys), cur, Q_COMP)
        p[f"w_uq{l}"] = xavier(next(keys), (Q_COMP, HIDDEN))
        p[f"b_uq{l}"] = bias(next(keys), Q_COMP, HIDDEN)
        p[f"w_dkv{l}"] = xavier(next(keys), (cur, KV_COMP))
        p[f"b_dkv{l}"] = bias(next(keys), cur, KV_COMP)
        p[f"w_uk{l}"] = xavier(next(keys), (KV_COMP, HIDDEN))
        p[f"b_uk{l}"] = bias(next(keys), KV_COMP, HIDDEN)
        p[f"w_uv{l}"] = xavier(next(keys), (KV_COMP, HIDDEN))
        p[f"b_uv{l}"] = bias(next(keys), KV_COMP, HIDDEN)
        p[f"w_o{l}"] = xavier(next(keys), (HIDDEN, HIDDEN))
        p[f"b_o{l}"] = bias(next(keys), HIDDEN, HIDDEN)
        p[f"gamma{l}"] = jnp.ones((HIDDEN,), jnp.float32)
        p[f"beta{l}"] = jnp.zeros((HIDDEN,), jnp.float32)
        cur = HIDDEN
    p["w_out"] = xavier(next(keys), (HIDDEN, OUT_FEATURES))
    p["b_out"] = bias(next(keys), HIDDEN, OUT_FEATURES)
    return p


def pack_params(p):
    """Pack all params into one weight slab and one bias/LN slab (2 DMAs)."""
    scale = 1.0 / math.sqrt(HEAD_DIM)
    w = jnp.zeros((W_ROWS, SLAB_W), jnp.float32)
    b = jnp.zeros((B_ROWS, SLAB_W), jnp.float32)

    def put(slab, r, arr):
        return slab.at[r:r + arr.shape[0], 0:arr.shape[1]].set(arr)

    w = put(w, R_RES, p["res"])
    for l in range(NUM_LAYERS):
        r_dqkv, r_uq, r_ukv, r_wo, _ = LAYER_W_ROWS[l]
        w = put(w, r_dqkv, jnp.concatenate([p[f"w_dq{l}"], p[f"w_dkv{l}"]], axis=1))
        w = put(w, r_uq, p[f"w_uq{l}"] * scale)                  # fold attn scale
        w = put(w, r_ukv, jnp.concatenate([p[f"w_uk{l}"], p[f"w_uv{l}"]], axis=1))
        w = put(w, r_wo, p[f"w_o{l}"])
        base = 6 * l
        b = b.at[base + 0, 0:QKV].set(jnp.concatenate([p[f"b_dq{l}"], p[f"b_dkv{l}"]]))
        b = b.at[base + 1, 0:HIDDEN].set(p[f"b_uq{l}"] * scale)  # fold attn scale
        b = b.at[base + 2, 0:2 * HIDDEN].set(jnp.concatenate([p[f"b_uk{l}"], p[f"b_uv{l}"]]))
        b = b.at[base + 3, 0:HIDDEN].set(p[f"b_o{l}"])
        b = b.at[base + 4, 0:HIDDEN].set(p[f"gamma{l}"])
        b = b.at[base + 5, 0:HIDDEN].set(p[f"beta{l}"])
    w = put(w, R_OUT, p["w_out"])
    b = b.at[B_OUT_ROW, 0:OUT_FEATURES].set(p["b_out"])
    return w, b


def gnn_model_only_mla(x, w_slab, b_slab):
    vmem = pl.BlockSpec(memory_space=pltpu.MemorySpace.VMEM)
    return pl.pallas_call(
        _gnn_mla_kernel,
        out_shape=jax.ShapeDtypeStruct((x.shape[0], OUT_FEATURES), jnp.float32),
        in_specs=[vmem, vmem, vmem],
        out_specs=vmem,
    )(x, w_slab, b_slab)


if __name__ == "__main__":
    key = jax.random.PRNGKey(0)
    kx, kp = jax.random.split(key, 2)
    x = jax.random.normal(kx, (NUM_NODES, IN_FEATURES), jnp.float32)
    # edge_index built for interface parity with the torch module (unused: full attention)
    src = jnp.arange(NUM_NODES, dtype=jnp.int32)
    edge_index = jnp.stack([src, (src + 1) % NUM_NODES])

    params = init_params(kp)
    w_slab, b_slab = pack_params(params)

    out = gnn_model_only_mla(x, w_slab, b_slab)
    out = jax.block_until_ready(out)
    assert out.shape == (NUM_NODES, OUT_FEATURES)
    assert bool(jnp.all(jnp.isfinite(out)))
    # log_softmax rows should sum to ~1 in prob space
    assert bool(jnp.all(jnp.abs(jnp.sum(jnp.exp(out), axis=1) - 1.0) < 1e-2))
    print("KERNEL_OK")
</pallas_src>

<mosaic_0001>
module attributes {stable_mosaic.version = 11 : i64} {
  func.func @_gnn_mla_kernel(%arg0: memref<8x16xf32, #tpu.memory_space<vmem>>, %arg1: memref<192x64xf32, #tpu.memory_space<vmem>>, %arg2: memref<16x64xf32, #tpu.memory_space<vmem>>, %arg3: memref<8x4xf32, #tpu.memory_space<vmem>>) attributes {dimension_semantics = [], scalar_prefetch = 0 : i64, scratch_operands = 0 : i64, tpu.core_type = #tpu.core_type<tc>} {
    %c0 = arith.constant 0 : index
    %c0_0 = arith.constant 0 : index
    %0 = vector.load %arg0[%c0, %c0_0] : memref<8x16xf32, #tpu.memory_space<vmem>>, vector<8x16xf32>
    %c0_1 = arith.constant 0 : index
    %c0_2 = arith.constant 0 : index
    %1 = vector.load %arg1[%c0_1, %c0_2] : memref<192x64xf32, #tpu.memory_space<vmem>>, vector<16x32xf32>
    %2 = arith.truncf %0 : vector<8x16xf32> to vector<8x16xbf16>
    %3 = arith.truncf %1 : vector<16x32xf32> to vector<16x32xbf16>
    %cst = arith.constant dense<0.000000e+00> : vector<8x32xf32>
    %4 = tpu.matmul %2, %3, %cst {dimension_numbers = #tpu.dot_dimension_numbers<[1], [0], [0], [1], [0, 0, 1, 1], [], []>} : vector<8x16xbf16>, vector<16x32xbf16>, vector<8x32xf32> -> vector<8x32xf32>
    %c16 = arith.constant 16 : index
    %c0_3 = arith.constant 0 : index
    %5 = vector.load %arg1[%c16, %c0_3] : memref<192x64xf32, #tpu.memory_space<vmem>>, vector<16x16xf32>
    %6 = arith.truncf %0 : vector<8x16xf32> to vector<8x16xbf16>
    %7 = arith.truncf %5 : vector<16x16xf32> to vector<16x16xbf16>
    %cst_4 = arith.constant dense<0.000000e+00> : vector<8x16xf32>
    %8 = tpu.matmul %6, %7, %cst_4 {dimension_numbers = #tpu.dot_dimension_numbers<[1], [0], [0], [1], [0, 0, 1, 1], [], []>} : vector<8x16xbf16>, vector<16x16xbf16>, vector<8x16xf32> -> vector<8x16xf32>
    %c0_5 = arith.constant 0 : index
    %c0_6 = arith.constant 0 : index
    %9 = vector.load %arg2[%c0_5, %c0_6] : memref<16x64xf32, #tpu.memory_space<vmem>>, vector<1x16xf32>
    %10 = vector.broadcast %9 : vector<1x16xf32> to vector<8x16xf32>
    %11 = arith.addf %8, %10 : vector<8x16xf32>
    %12 = vector.extract_strided_slice %11 {offsets = [0, 0], sizes = [8, 8], strides = [1, 1]} : vector<8x16xf32> to vector<8x8xf32>
    %13 = vector.extract_strided_slice %11 {offsets = [0, 8], sizes = [8, 8], strides = [1, 1]} : vector<8x16xf32> to vector<8x8xf32>
    %c32 = arith.constant 32 : index
    %c0_7 = arith.constant 0 : index
    %14 = vector.load %arg1[%c32, %c0_7] : memref<192x64xf32, #tpu.memory_space<vmem>>, vector<8x32xf32>
    %15 = arith.truncf %12 : vector<8x8xf32> to vector<8x8xbf16>
    %16 = arith.truncf %14 : vector<8x32xf32> to vector<8x32xbf16>
    %cst_8 = arith.constant dense<0.000000e+00> : vector<8x32xf32>
    %17 = tpu.matmul %15, %16, %cst_8 {dimension_numbers = #tpu.dot_dimension_numbers<[1], [0], [0], [1], [0, 0, 1, 1], [], []>} : vector<8x8xbf16>, vector<8x32xbf16>, vector<8x32xf32> -> vector<8x32xf32>
    %c1 = arith.constant 1 : index
    %c0_9 = arith.constant 0 : index
    %18 = vector.load %arg2[%c1, %c0_9] : memref<16x64xf32, #tpu.memory_space<vmem>>, vector<1x32xf32>
    %19 = vector.broadcast %18 : vector<1x32xf32> to vector<8x32xf32>
    %20 = arith.addf %17, %19 : vector<8x32xf32>
    %c40 = arith.constant 40 : index
    %c0_10 = arith.constant 0 : index
    %21 = vector.load %arg1[%c40, %c0_10] : memref<192x64xf32, #tpu.memory_space<vmem>>, vector<8x64xf32>
    %22 = arith.truncf %13 : vector<8x8xf32> to vector<8x8xbf16>
    %23 = arith.truncf %21 : vector<8x64xf32> to vector<8x64xbf16>
    %cst_11 = arith.constant dense<0.000000e+00> : vector<8x64xf32>
    %24 = tpu.matmul %22, %23, %cst_11 {dimension_numbers = #tpu.dot_dimension_numbers<[1], [0], [0], [1], [0, 0, 1, 1], [], []>} : vector<8x8xbf16>, vector<8x64xbf16>, vector<8x64xf32> -> vector<8x64xf32>
    %c2 = arith.constant 2 : index
    %c0_12 = arith.constant 0 : index
    %25 = vector.load %arg2[%c2, %c0_12] : memref<16x64xf32, #tpu.memory_space<vmem>>, vector<1x64xf32>
    %26 = vector.broadcast %25 : vector<1x64xf32> to vector<8x64xf32>
    %27 = arith.addf %24, %26 : vector<8x64xf32>
    %28 = vector.extract_strided_slice %27 {offsets = [0, 0], sizes = [8, 32], strides = [1, 1]} : vector<8x64xf32> to vector<8x32xf32>
    %29 = vector.extract_strided_slice %27 {offsets = [0, 32], sizes = [8, 32], strides = [1, 1]} : vector<8x64xf32> to vector<8x32xf32>
    %30 = tpu.transpose %28, [1, 0] : vector<8x32xf32> -> vector<32x8xf32>
    %31 = arith.truncf %20 : vector<8x32xf32> to vector<8x32xbf16>
    %32 = arith.truncf %30 : vector<32x8xf32> to vector<32x8xbf16>
    %33 = arith.truncf %29 : vector<8x32xf32> to vector<8x32xbf16>
    %34 = vector.extract_strided_slice %31 {offsets = [0, 0], sizes = [8, 8], strides = [1, 1]} : vector<8x32xbf16> to vector<8x8xbf16>
    %35 = vector.extract_strided_slice %32 {offsets = [0, 0], sizes = [8, 8], strides = [1, 1]} : vector<32x8xbf16> to vector<8x8xbf16>
    %cst_13 = arith.constant dense<0.000000e+00> : vector<8x8xf32>
    %36 = tpu.matmul %34, %35, %cst_13 {dimension_numbers = #tpu.dot_dimension_numbers<[1], [0], [0], [1], [0, 0, 1, 1], [], []>} : vector<8x8xbf16>, vector<8x8xbf16>, vector<8x8xf32> -> vector<8x8xf32>
    %cst_14 = arith.constant dense<0xFF800000> : vector<8xf32>
    %37 = vector.multi_reduction <maximumf>, %36, %cst_14 [1] : vector<8x8xf32> to vector<8xf32>
    %38 = vector.shape_cast %37 : vector<8xf32> to vector<8x1xf32>
    %39 = vector.broadcast %38 : vector<8x1xf32> to vector<8x8xf32>
    %40 = arith.subf %36, %39 : vector<8x8xf32>
    %41 = math.exp %40 : vector<8x8xf32>
    %cst_15 = arith.constant dense<0.000000e+00> : vector<8xf32>
    %42 = vector.multi_reduction <add>, %41, %cst_15 [1] : vector<8x8xf32> to vector<8xf32>
    %43 = vector.shape_cast %42 : vector<8xf32> to vector<8x1xf32>
    %44 = tpu.reciprocal %43 {approx = true} : vector<8x1xf32> -> vector<8x1xf32>
    %45 = vector.broadcast %44 : vector<8x1xf32> to vector<8x8xf32>
    %46 = arith.mulf %41, %45 : vector<8x8xf32>
    %47 = arith.truncf %46 : vector<8x8xf32> to vector<8x8xbf16>
    %48 = vector.extract_strided_slice %33 {offsets = [0, 0], sizes = [8, 8], strides = [1, 1]} : vector<8x32xbf16> to vector<8x8xbf16>
    %cst_16 = arith.constant dense<0.000000e+00> : vector<8x8xf32>
    %49 = tpu.matmul %47, %48, %cst_16 {dimension_numbers = #tpu.dot_dimension_numbers<[1], [0], [0], [1], [0, 0, 1, 1], [], []>} : vector<8x8xbf16>, vector<8x8xbf16>, vector<8x8xf32> -> vector<8x8xf32>
    %c48 = arith.constant 48 : index
    %c0_17 = arith.constant 0 : index
    %50 = vector.load %arg1[%c48, %c0_17] : memref<192x64xf32, #tpu.memory_space<vmem>>, vector<8x32xf32>
    %51 = arith.truncf %49 : vector<8x8xf32> to vector<8x8xbf16>
    %52 = arith.truncf %50 : vector<8x32xf32> to vector<8x32xbf16>
    %cst_18 = arith.constant dense<0.000000e+00> : vector<8x32xf32>
    %53 = tpu.matmul %51, %52, %cst_18 {dimension_numbers = #tpu.dot_dimension_numbers<[1], [0], [0], [1], [0, 0, 1, 1], [], []>} : vector<8x8xbf16>, vector<8x32xbf16>, vector<8x32xf32> -> vector<8x32xf32>
    %54 = vector.extract_strided_slice %31 {offsets = [0, 8], sizes = [8, 8], strides = [1, 1]} : vector<8x32xbf16> to vector<8x8xbf16>
    %55 = vector.extract_strided_slice %32 {offsets = [8, 0], sizes = [8, 8], strides = [1, 1]} : vector<32x8xbf16> to vector<8x8xbf16>
    %cst_19 = arith.constant dense<0.000000e+00> : vector<8x8xf32>
    %56 = tpu.matmul %54, %55, %cst_19 {dimension_numbers = #tpu.dot_dimension_numbers<[1], [0], [0], [1], [0, 0, 1, 1], [], []>} : vector<8x8xbf16>, vector<8x8xbf16>, vector<8x8xf32> -> vector<8x8xf32>
    %cst_20 = arith.constant dense<0xFF800000> : vector<8xf32>
    %57 = vector.multi_reduction <maximumf>, %56, %cst_20 [1] : vector<8x8xf32> to vector<8xf32>
    %58 = vector.shape_cast %57 : vector<8xf32> to vector<8x1xf32>
    %59 = vector.broadcast %58 : vector<8x1xf32> to vector<8x8xf32>
    %60 = arith.subf %56, %59 : vector<8x8xf32>
    %61 = math.exp %60 : vector<8x8xf32>
    %cst_21 = arith.constant dense<0.000000e+00> : vector<8xf32>
    %62 = vector.multi_reduction <add>, %61, %cst_21 [1] : vector<8x8xf32> to vector<8xf32>
    %63 = vector.shape_cast %62 : vector<8xf32> to vector<8x1xf32>
    %64 = tpu.reciprocal %63 {approx = true} : vector<8x1xf32> -> vector<8x1xf32>
    %65 = vector.broadcast %64 : vector<8x1xf32> to vector<8x8xf32>
    %66 = arith.mulf %61, %65 : vector<8x8xf32>
    %67 = arith.truncf %66 : vector<8x8xf32> to vector<8x8xbf16>
    %68 = vector.extract_strided_slice %33 {offsets = [0, 8], sizes = [8, 8], strides = [1, 1]} : vector<8x32xbf16> to vector<8x8xbf16>
    %cst_22 = arith.constant dense<0.000000e+00> : vector<8x8xf32>
    %69 = tpu.matmul %67, %68, %cst_22 {dimension_numbers = #tpu.dot_dimension_numbers<[1], [0], [0], [1], [0, 0, 1, 1], [], []>} : vector<8x8xbf16>, vector<8x8xbf16>, vector<8x8xf32> -> vector<8x8xf32>
    %c56 = arith.constant 56 : index
    %c0_23 = arith.constant 0 : index
    %70 = vector.load %arg1[%c56, %c0_23] : memref<192x64xf32, #tpu.memory_space<vmem>>, vector<8x32xf32>
    %71 = arith.truncf %69 : vector<8x8xf32> to vector<8x8xbf16>
    %72 = arith.truncf %70 : vector<8x32xf32> to vector<8x32xbf16>
    %cst_24 = arith.constant dense<0.000000e+00> : vector<8x32xf32>
    %73 = tpu.matmul %71, %72, %cst_24 {dimension_numbers = #tpu.dot_dimension_numbers<[1], [0], [0], [1], [0, 0, 1, 1], [], []>} : vector<8x8xbf16>, vector<8x32xbf16>, vector<8x32xf32> -> vector<8x32xf32>
    %74 = arith.addf %53, %73 : vector<8x32xf32>
    %75 = vector.extract_strided_slice %31 {offsets = [0, 16], sizes = [8, 8], strides = [1, 1]} : vector<8x32xbf16> to vector<8x8xbf16>
    %76 = vector.extract_strided_slice %32 {offsets = [16, 0], sizes = [8, 8], strides = [1, 1]} : vector<32x8xbf16> to vector<8x8xbf16>
    %cst_25 = arith.constant dense<0.000000e+00> : vector<8x8xf32>
    %77 = tpu.matmul %75, %76, %cst_25 {dimension_numbers = #tpu.dot_dimension_numbers<[1], [0], [0], [1], [0, 0, 1, 1], [], []>} : vector<8x8xbf16>, vector<8x8xbf16>, vector<8x8xf32> -> vector<8x8xf32>
    %cst_26 = arith.constant dense<0xFF800000> : vector<8xf32>
    %78 = vector.multi_reduction <maximumf>, %77, %cst_26 [1] : vector<8x8xf32> to vector<8xf32>
    %79 = vector.shape_cast %78 : vector<8xf32> to vector<8x1xf32>
    %80 = vector.broadcast %79 : vector<8x1xf32> to vector<8x8xf32>
    %81 = arith.subf %77, %80 : vector<8x8xf32>
    %82 = math.exp %81 : vector<8x8xf32>
    %cst_27 = arith.constant dense<0.000000e+00> : vector<8xf32>
    %83 = vector.multi_reduction <add>, %82, %cst_27 [1] : vector<8x8xf32> to vector<8xf32>
    %84 = vector.shape_cast %83 : vector<8xf32> to vector<8x1xf32>
    %85 = tpu.reciprocal %84 {approx = true} : vector<8x1xf32> -> vector<8x1xf32>
    %86 = vector.broadcast %85 : vector<8x1xf32> to vector<8x8xf32>
    %87 = arith.mulf %82, %86 : vector<8x8xf32>
    %88 = arith.truncf %87 : vector<8x8xf32> to vector<8x8xbf16>
    %89 = vector.extract_strided_slice %33 {offsets = [0, 16], sizes = [8, 8], strides = [1, 1]} : vector<8x32xbf16> to vector<8x8xbf16>
    %cst_28 = arith.constant dense<0.000000e+00> : vector<8x8xf32>
    %90 = tpu.matmul %88, %89, %cst_28 {dimension_numbers = #tpu.dot_dimension_numbers<[1], [0], [0], [1], [0, 0, 1, 1], [], []>} : vector<8x8xbf16>, vector<8x8xbf16>, vector<8x8xf32> -> vector<8x8xf32>
    %c64 = arith.constant 64 : index
    %c0_29 = arith.constant 0 : index
    %91 = vector.load %arg1[%c64, %c0_29] : memref<192x64xf32, #tpu.memory_space<vmem>>, vector<8x32xf32>
    %92 = arith.truncf %90 : vector<8x8xf32> to vector<8x8xbf16>
    %93 = arith.truncf %91 : vector<8x32xf32> to vector<8x32xbf16>
    %cst_30 = arith.constant dense<0.000000e+00> : vector<8x32xf32>
    %94 = tpu.matmul %92, %93, %cst_30 {dimension_numbers = #tpu.dot_dimension_numbers<[1], [0], [0], [1], [0, 0, 1, 1], [], []>} : vector<8x8xbf16>, vector<8x32xbf16>, vector<8x32xf32> -> vector<8x32xf32>
    %95 = arith.addf %74, %94 : vector<8x32xf32>
    %96 = vector.extract_strided_slice %31 {offsets = [0, 24], sizes = [8, 8], strides = [1, 1]} : vector<8x32xbf16> to vector<8x8xbf16>
    %97 = vector.extract_strided_slice %32 {offsets = [24, 0], sizes = [8, 8], strides = [1, 1]} : vector<32x8xbf16> to vector<8x8xbf16>
    %cst_31 = arith.constant dense<0.000000e+00> : vector<8x8xf32>
    %98 = tpu.matmul %96, %97, %cst_31 {dimension_numbers = #tpu.dot_dimension_numbers<[1], [0], [0], [1], [0, 0, 1, 1], [], []>} : vector<8x8xbf16>, vector<8x8xbf16>, vector<8x8xf32> -> vector<8x8xf32>
    %cst_32 = arith.constant dense<0xFF800000> : vector<8xf32>
    %99 = vector.multi_reduction <maximumf>, %98, %cst_32 [1] : vector<8x8xf32> to vector<8xf32>
    %100 = vector.shape_cast %99 : vector<8xf32> to vector<8x1xf32>
    %101 = vector.broadcast %100 : vector<8x1xf32> to vector<8x8xf32>
    %102 = arith.subf %98, %101 : vector<8x8xf32>
    %103 = math.exp %102 : vector<8x8xf32>
    %cst_33 = arith.constant dense<0.000000e+00> : vector<8xf32>
    %104 = vector.multi_reduction <add>, %103, %cst_33 [1] : vector<8x8xf32> to vector<8xf32>
    %105 = vector.shape_cast %104 : vector<8xf32> to vector<8x1xf32>
    %106 = tpu.reciprocal %105 {approx = true} : vector<8x1xf32> -> vector<8x1xf32>
    %107 = vector.broadcast %106 : vector<8x1xf32> to vector<8x8xf32>
    %108 = arith.mulf %103, %107 : vector<8x8xf32>
    %109 = arith.truncf %108 : vector<8x8xf32> to vector<8x8xbf16>
    %110 = vector.extract_strided_slice %33 {offsets = [0, 24], sizes = [8, 8], strides = [1, 1]} : vector<8x32xbf16> to vector<8x8xbf16>
    %cst_34 = arith.constant dense<0.000000e+00> : vector<8x8xf32>
    %111 = tpu.matmul %109, %110, %cst_34 {dimension_numbers = #tpu.dot_dimension_numbers<[1], [0], [0], [1], [0, 0, 1, 1], [], []>} : vector<8x8xbf16>, vector<8x8xbf16>, vector<8x8xf32> -> vector<8x8xf32>
    %c72 = arith.constant 72 : index
    %c0_35 = arith.constant 0 : index
    %112 = vector.load %arg1[%c72, %c0_35] : memref<192x64xf32, #tpu.memory_space<vmem>>, vector<8x32xf32>
    %113 = arith.truncf %111 : vector<8x8xf32> to vector<8x8xbf16>
    %114 = arith.truncf %112 : vector<8x32xf32> to vector<8x32xbf16>
    %cst_36 = arith.constant dense<0.000000e+00> : vector<8x32xf32>
    %115 = tpu.matmul %113, %114, %cst_36 {dimension_numbers = #tpu.dot_dimension_numbers<[1], [0], [0], [1], [0, 0, 1, 1], [], []>} : vector<8x8xbf16>, vector<8x32xbf16>, vector<8x32xf32> -> vector<8x32xf32>
    %116 = arith.addf %95, %115 : vector<8x32xf32>
    %c3 = arith.constant 3 : index
    %c0_37 = arith.constant 0 : index
    %117 = vector.load %arg2[%c3, %c0_37] : memref<16x64xf32, #tpu.memory_space<vmem>>, vector<1x32xf32>
    %118 = vector.broadcast %117 : vector<1x32xf32> to vector<8x32xf32>
    %119 = arith.addf %116, %118 : vector<8x32xf32>
    %120 = arith.addf %119, %4 : vector<8x32xf32>
    %cst_38 = arith.constant dense<0.000000e+00> : vector<8xf32>
    %121 = vector.multi_reduction <add>, %120, %cst_38 [1] : vector<8x32xf32> to vector<8xf32>
    %122 = vector.shape_cast %121 : vector<8xf32> to vector<8x1xf32>
    %cst_39 = arith.constant 3.200000e+01 : f32
    %123 = vector.broadcast %cst_39 : f32 to vector<8x1xf32>
    %124 = arith.divf %122, %123 : vector<8x1xf32>
    %125 = arith.mulf %120, %120 : vector<8x32xf32>
    %cst_40 = arith.constant dense<0.000000e+00> : vector<8xf32>
    %126 = vector.multi_reduction <add>, %125, %cst_40 [1] : vector<8x32xf32> to vector<8xf32>
    %127 = vector.shape_cast %126 : vector<8xf32> to vector<8x1xf32>
    %cst_41 = arith.constant 3.200000e+01 : f32
    %128 = vector.broadcast %cst_41 : f32 to vector<8x1xf32>
    %129 = arith.divf %127, %128 : vector<8x1xf32>
    %130 = arith.mulf %124, %124 : vector<8x1xf32>
    %131 = arith.subf %129, %130 : vector<8x1xf32>
    %132 = vector.broadcast %124 : vector<8x1xf32> to vector<8x32xf32>
    %133 = arith.subf %120, %132 : vector<8x32xf32>
    %cst_42 = arith.constant 9.99999974E-6 : f32
    %134 = vector.broadcast %cst_42 : f32 to vector<8x1xf32>
    %135 = arith.addf %131, %134 : vector<8x1xf32>
    %136 = math.rsqrt %135 : vector<8x1xf32>
    %137 = vector.broadcast %136 : vector<8x1xf32> to vector<8x32xf32>
    %138 = arith.mulf %133, %137 : vector<8x32xf32>
    %c4 = arith.constant 4 : index
    %c0_43 = arith.constant 0 : index
    %139 = vector.load %arg2[%c4, %c0_43] : memref<16x64xf32, #tpu.memory_space<vmem>>, vector<1x32xf32>
    %c5 = arith.constant 5 : index
    %c0_44 = arith.constant 0 : index
    %140 = vector.load %arg2[%c5, %c0_44] : memref<16x64xf32, #tpu.memory_space<vmem>>, vector<1x32xf32>
    %141 = vector.broadcast %139 : vector<1x32xf32> to vector<8x32xf32>
    %142 = arith.mulf %138, %141 : vector<8x32xf32>
    %143 = vector.broadcast %140 : vector<1x32xf32> to vector<8x32xf32>
    %144 = arith.addf %142, %143 : vector<8x32xf32>
    %cst_45 = arith.constant 0.000000e+00 : f32
    %145 = vector.broadcast %cst_45 : f32 to vector<8x32xf32>
    %146 = arith.maximumf %144, %145 : vector<8x32xf32>
    %c80 = arith.constant 80 : index
    %c0_46 = arith.constant 0 : index
    %147 = vector.load %arg1[%c80, %c0_46] : memref<192x64xf32, #tpu.memory_space<vmem>>, vector<32x16xf32>
    %148 = arith.truncf %146 : vector<8x32xf32> to vector<8x32xbf16>
    %149 = arith.truncf %147 : vector<32x16xf32> to vector<32x16xbf16>
    %cst_47 = arith.constant dense<0.000000e+00> : vector<8x16xf32>
    %150 = tpu.matmul %148, %149, %cst_47 {dimension_numbers = #tpu.dot_dimension_numbers<[1], [0], [0], [1], [0, 0, 1, 1], [], []>} : vector<8x32xbf16>, vector<32x16xbf16>, vector<8x16xf32> -> vector<8x16xf32>
    %c6 = arith.constant 6 : index
    %c0_48 = arith.constant 0 : index
    %151 = vector.load %arg2[%c6, %c0_48] : memref<16x64xf32, #tpu.memory_space<vmem>>, vector<1x16xf32>
    %152 = vector.broadcast %151 : vector<1x16xf32> to vector<8x16xf32>
    %153 = arith.addf %150, %152 : vector<8x16xf32>
    %154 = vector.extract_strided_slice %153 {offsets = [0, 0], sizes = [8, 8], strides = [1, 1]} : vector<8x16xf32> to vector<8x8xf32>
    %155 = vector.extract_strided_slice %153 {offsets = [0, 8], sizes = [8, 8], strides = [1, 1]} : vector<8x16xf32> to vector<8x8xf32>
    %c112 = arith.constant 112 : index
    %c0_49 = arith.constant 0 : index
    %156 = vector.load %arg1[%c112, %c0_49] : memref<192x64xf32, #tpu.memory_space<vmem>>, vector<8x32xf32>
    %157 = arith.truncf %154 : vector<8x8xf32> to vector<8x8xbf16>
    %158 = arith.truncf %156 : vector<8x32xf32> to vector<8x32xbf16>
    %cst_50 = arith.constant dense<0.000000e+00> : vector<8x32xf32>
    %159 = tpu.matmul %157, %158, %cst_50 {dimension_numbers = #tpu.dot_dimension_numbers<[1], [0], [0], [1], [0, 0, 1, 1], [], []>} : vector<8x8xbf16>, vector<8x32xbf16>, vector<8x32xf32> -> vector<8x32xf32>
    %c7 = arith.constant 7 : index
    %c0_51 = arith.constant 0 : index
    %160 = vector.load %arg2[%c7, %c0_51] : memref<16x64xf32, #tpu.memory_space<vmem>>, vector<1x32xf32>
    %161 = vector.broadcast %160 : vector<1x32xf32> to vector<8x32xf32>
    %162 = arith.addf %159, %161 : vector<8x32xf32>
    %c120 = arith.constant 120 : index
    %c0_52 = arith.constant 0 : index
    %163 = vector.load %arg1[%c120, %c0_52] : memref<192x64xf32, #tpu.memory_space<vmem>>, vector<8x64xf32>
    %164 = arith.truncf %155 : vector<8x8xf32> to vector<8x8xbf16>
    %165 = arith.truncf %163 : vector<8x64xf32> to vector<8x64xbf16>
    %cst_53 = arith.constant dense<0.000000e+00> : vector<8x64xf32>
    %166 = tpu.matmul %164, %165, %cst_53 {dimension_numbers = #tpu.dot_dimension_numbers<[1], [0], [0], [1], [0, 0, 1, 1], [], []>} : vector<8x8xbf16>, vector<8x64xbf16>, vector<8x64xf32> -> vector<8x64xf32>
    %c8 = arith.constant 8 : index
    %c0_54 = arith.constant 0 : index
    %167 = vector.load %arg2[%c8, %c0_54] : memref<16x64xf32, #tpu.memory_space<vmem>>, vector<1x64xf32>
    %168 = vector.broadcast %167 : vector<1x64xf32> to vector<8x64xf32>
    %169 = arith.addf %166, %168 : vector<8x64xf32>
    %170 = vector.extract_strided_slice %169 {offsets = [0, 0], sizes = [8, 32], strides = [1, 1]} : vector<8x64xf32> to vector<8x32xf32>
    %171 = vector.extract_strided_slice %169 {offsets = [0, 32], sizes = [8, 32], strides = [1, 1]} : vector<8x64xf32> to vector<8x32xf32>
    %172 = tpu.transpose %170, [1, 0] : vector<8x32xf32> -> vector<32x8xf32>
    %173 = arith.truncf %162 : vector<8x32xf32> to vector<8x32xbf16>
    %174 = arith.truncf %172 : vector<32x8xf32> to vector<32x8xbf16>
    %175 = arith.truncf %171 : vector<8x32xf32> to vector<8x32xbf16>
    %176 = vector.extract_strided_slice %173 {offsets = [0, 0], sizes = [8, 8], strides = [1, 1]} : vector<8x32xbf16> to vector<8x8xbf16>
    %177 = vector.extract_strided_slice %174 {offsets = [0, 0], sizes = [8, 8], strides = [1, 1]} : vector<32x8xbf16> to vector<8x8xbf16>
    %cst_55 = arith.constant dense<0.000000e+00> : vector<8x8xf32>
    %178 = tpu.matmul %176, %177, %cst_55 {dimension_numbers = #tpu.dot_dimension_numbers<[1], [0], [0], [1], [0, 0, 1, 1], [], []>} : vector<8x8xbf16>, vector<8x8xbf16>, vector<8x8xf32> -> vector<8x8xf32>
    %cst_56 = arith.constant dense<0xFF800000> : vector<8xf32>
    %179 = vector.multi_reduction <maximumf>, %178, %cst_56 [1] : vector<8x8xf32> to vector<8xf32>
    %180 = vector.shape_cast %179 : vector<8xf32> to vector<8x1xf32>
    %181 = vector.broadcast %180 : vector<8x1xf32> to vector<8x8xf32>
    %182 = arith.subf %178, %181 : vector<8x8xf32>
    %183 = math.exp %182 : vector<8x8xf32>
    %cst_57 = arith.constant dense<0.000000e+00> : vector<8xf32>
    %184 = vector.multi_reduction <add>, %183, %cst_57 [1] : vector<8x8xf32> to vector<8xf32>
    %185 = vector.shape_cast %184 : vector<8xf32> to vector<8x1xf32>
    %186 = tpu.reciprocal %185 {approx = true} : vector<8x1xf32> -> vector<8x1xf32>
    %187 = vector.broadcast %186 : vector<8x1xf32> to vector<8x8xf32>
    %188 = arith.mulf %183, %187 : vector<8x8xf32>
    %189 = arith.truncf %188 : vector<8x8xf32> to vector<8x8xbf16>
    %190 = vector.extract_strided_slice %175 {offsets = [0, 0], sizes = [8, 8], strides = [1, 1]} : vector<8x32xbf16> to vector<8x8xbf16>
    %cst_58 = arith.constant dense<0.000000e+00> : vector<8x8xf32>
    %191 = tpu.matmul %189, %190, %cst_58 {dimension_numbers = #tpu.dot_dimension_numbers<[1], [0], [0], [1], [0, 0, 1, 1], [], []>} : vector<8x8xbf16>, vector<8x8xbf16>, vector<8x8xf32> -> vector<8x8xf32>
    %c128 = arith.constant 128 : index
    %c0_59 = arith.constant 0 : index
    %192 = vector.load %arg1[%c128, %c0_59] : memref<192x64xf32, #tpu.memory_space<vmem>>, vector<8x32xf32>
    %193 = arith.truncf %191 : vector<8x8xf32> to vector<8x8xbf16>
    %194 = arith.truncf %192 : vector<8x32xf32> to vector<8x32xbf16>
    %cst_60 = arith.constant dense<0.000000e+00> : vector<8x32xf32>
    %195 = tpu.matmul %193, %194, %cst_60 {dimension_numbers = #tpu.dot_dimension_numbers<[1], [0], [0], [1], [0, 0, 1, 1], [], []>} : vector<8x8xbf16>, vector<8x32xbf16>, vector<8x32xf32> -> vector<8x32xf32>
    %196 = vector.extract_strided_slice %173 {offsets = [0, 8], sizes = [8, 8], strides = [1, 1]} : vector<8x32xbf16> to vector<8x8xbf16>
    %197 = vector.extract_strided_slice %174 {offsets = [8, 0], sizes = [8, 8], strides = [1, 1]} : vector<32x8xbf16> to vector<8x8xbf16>
    %cst_61 = arith.constant dense<0.000000e+00> : vector<8x8xf32>
    %198 = tpu.matmul %196, %197, %cst_61 {dimension_numbers = #tpu.dot_dimension_numbers<[1], [0], [0], [1], [0, 0, 1, 1], [], []>} : vector<8x8xbf16>, vector<8x8xbf16>, vector<8x8xf32> -> vector<8x8xf32>
    %cst_62 = arith.constant dense<0xFF800000> : vector<8xf32>
    %199 = vector.multi_reduction <maximumf>, %198, %cst_62 [1] : vector<8x8xf32> to vector<8xf32>
    %200 = vector.shape_cast %199 : vector<8xf32> to vector<8x1xf32>
    %201 = vector.broadcast %200 : vector<8x1xf32> to vector<8x8xf32>
    %202 = arith.subf %198, %201 : vector<8x8xf32>
    %203 = math.exp %202 : vector<8x8xf32>
    %cst_63 = arith.constant dense<0.000000e+00> : vector<8xf32>
    %204 = vector.multi_reduction <add>, %203, %cst_63 [1] : vector<8x8xf32> to vector<8xf32>
    %205 = vector.shape_cast %204 : vector<8xf32> to vector<8x1xf32>
    %206 = tpu.reciprocal %205 {approx = true} : vector<8x1xf32> -> vector<8x1xf32>
    %207 = vector.broadcast %206 : vector<8x1xf32> to vector<8x8xf32>
    %208 = arith.mulf %203, %207 : vector<8x8xf32>
    %209 = arith.truncf %208 : vector<8x8xf32> to vector<8x8xbf16>
    %210 = vector.extract_strided_slice %175 {offsets = [0, 8], sizes = [8, 8], strides = [1, 1]} : vector<8x32xbf16> to vector<8x8xbf16>
    %cst_64 = arith.constant dense<0.000000e+00> : vector<8x8xf32>
    %211 = tpu.matmul %209, %210, %cst_64 {dimension_numbers = #tpu.dot_dimension_numbers<[1], [0], [0], [1], [0, 0, 1, 1], [], []>} : vector<8x8xbf16>, vector<8x8xbf16>, vector<8x8xf32> -> vector<8x8xf32>
    %c136 = arith.constant 136 : index
    %c0_65 = arith.constant 0 : index
    %212 = vector.load %arg1[%c136, %c0_65] : memref<192x64xf32, #tpu.memory_space<vmem>>, vector<8x32xf32>
    %213 = arith.truncf %211 : vector<8x8xf32> to vector<8x8xbf16>
    %214 = arith.truncf %212 : vector<8x32xf32> to vector<8x32xbf16>
    %cst_66 = arith.constant dense<0.000000e+00> : vector<8x32xf32>
    %215 = tpu.matmul %213, %214, %cst_66 {dimension_numbers = #tpu.dot_dimension_numbers<[1], [0], [0], [1], [0, 0, 1, 1], [], []>} : vector<8x8xbf16>, vector<8x32xbf16>, vector<8x32xf32> -> vector<8x32xf32>
    %216 = arith.addf %195, %215 : vector<8x32xf32>
    %217 = vector.extract_strided_slice %173 {offsets = [0, 16], sizes = [8, 8], strides = [1, 1]} : vector<8x32xbf16> to vector<8x8xbf16>
    %218 = vector.extract_strided_slice %174 {offsets = [16, 0], sizes = [8, 8], strides = [1, 1]} : vector<32x8xbf16> to vector<8x8xbf16>
    %cst_67 = arith.constant dense<0.000000e+00> : vector<8x8xf32>
    %219 = tpu.matmul %217, %218, %cst_67 {dimension_numbers = #tpu.dot_dimension_numbers<[1], [0], [0], [1], [0, 0, 1, 1], [], []>} : vector<8x8xbf16>, vector<8x8xbf16>, vector<8x8xf32> -> vector<8x8xf32>
    %cst_68 = arith.constant dense<0xFF800000> : vector<8xf32>
    %220 = vector.multi_reduction <maximumf>, %219, %cst_68 [1] : vector<8x8xf32> to vector<8xf32>
    %221 = vector.shape_cast %220 : vector<8xf32> to vector<8x1xf32>
    %222 = vector.broadcast %221 : vector<8x1xf32> to vector<8x8xf32>
    %223 = arith.subf %219, %222 : vector<8x8xf32>
    %224 = math.exp %223 : vector<8x8xf32>
    %cst_69 = arith.constant dense<0.000000e+00> : vector<8xf32>
    %225 = vector.multi_reduction <add>, %224, %cst_69 [1] : vector<8x8xf32> to vector<8xf32>
    %226 = vector.shape_cast %225 : vector<8xf32> to vector<8x1xf32>
    %227 = tpu.reciprocal %226 {approx = true} : vector<8x1xf32> -> vector<8x1xf32>
    %228 = vector.broadcast %227 : vector<8x1xf32> to vector<8x8xf32>
    %229 = arith.mulf %224, %228 : vector<8x8xf32>
    %230 = arith.truncf %229 : vector<8x8xf32> to vector<8x8xbf16>
    %231 = vector.extract_strided_slice %175 {offsets = [0, 16], sizes = [8, 8], strides = [1, 1]} : vector<8x32xbf16> to vector<8x8xbf16>
    %cst_70 = arith.constant dense<0.000000e+00> : vector<8x8xf32>
    %232 = tpu.matmul %230, %231, %cst_70 {dimension_numbers = #tpu.dot_dimension_numbers<[1], [0], [0], [1], [0, 0, 1, 1], [], []>} : vector<8x8xbf16>, vector<8x8xbf16>, vector<8x8xf32> -> vector<8x8xf32>
    %c144 = arith.constant 144 : index
    %c0_71 = arith.constant 0 : index
    %233 = vector.load %arg1[%c144, %c0_71] : memref<192x64xf32, #tpu.memory_space<vmem>>, vector<8x32xf32>
    %234 = arith.truncf %232 : vector<8x8xf32> to vector<8x8xbf16>
    %235 = arith.truncf %233 : vector<8x32xf32> to vector<8x32xbf16>
    %cst_72 = arith.constant dense<0.000000e+00> : vector<8x32xf32>
    %236 = tpu.matmul %234, %235, %cst_72 {dimension_numbers = #tpu.dot_dimension_numbers<[1], [0], [0], [1], [0, 0, 1, 1], [], []>} : vector<8x8xbf16>, vector<8x32xbf16>, vector<8x32xf32> -> vector<8x32xf32>
    %237 = arith.addf %216, %236 : vector<8x32xf32>
    %238 = vector.extract_strided_slice %173 {offsets = [0, 24], sizes = [8, 8], strides = [1, 1]} : vector<8x32xbf16> to vector<8x8xbf16>
    %239 = vector.extract_strided_slice %174 {offsets = [24, 0], sizes = [8, 8], strides = [1, 1]} : vector<32x8xbf16> to vector<8x8xbf16>
    %cst_73 = arith.constant dense<0.000000e+00> : vector<8x8xf32>
    %240 = tpu.matmul %238, %239, %cst_73 {dimension_numbers = #tpu.dot_dimension_numbers<[1], [0], [0], [1], [0, 0, 1, 1], [], []>} : vector<8x8xbf16>, vector<8x8xbf16>, vector<8x8xf32> -> vector<8x8xf32>
    %cst_74 = arith.constant dense<0xFF800000> : vector<8xf32>
    %241 = vector.multi_reduction <maximumf>, %240, %cst_74 [1] : vector<8x8xf32> to vector<8xf32>
    %242 = vector.shape_cast %241 : vector<8xf32> to vector<8x1xf32>
    %243 = vector.broadcast %242 : vector<8x1xf32> to vector<8x8xf32>
    %244 = arith.subf %240, %243 : vector<8x8xf32>
    %245 = math.exp %244 : vector<8x8xf32>
    %cst_75 = arith.constant dense<0.000000e+00> : vector<8xf32>
    %246 = vector.multi_reduction <add>, %245, %cst_75 [1] : vector<8x8xf32> to vector<8xf32>
    %247 = vector.shape_cast %246 : vector<8xf32> to vector<8x1xf32>
    %248 = tpu.reciprocal %247 {approx = true} : vector<8x1xf32> -> vector<8x1xf32>
    %249 = vector.broadcast %248 : vector<8x1xf32> to vector<8x8xf32>
    %250 = arith.mulf %245, %249 : vector<8x8xf32>
    %251 = arith.truncf %250 : vector<8x8xf32> to vector<8x8xbf16>
    %252 = vector.extract_strided_slice %175 {offsets = [0, 24], sizes = [8, 8], strides = [1, 1]} : vector<8x32xbf16> to vector<8x8xbf16>
    %cst_76 = arith.constant dense<0.000000e+00> : vector<8x8xf32>
    %253 = tpu.matmul %251, %252, %cst_76 {dimension_numbers = #tpu.dot_dimension_numbers<[1], [0], [0], [1], [0, 0, 1, 1], [], []>} : vector<8x8xbf16>, vector<8x8xbf16>, vector<8x8xf32> -> vector<8x8xf32>
    %c152 = arith.constant 152 : index
    %c0_77 = arith.constant 0 : index
    %254 = vector.load %arg1[%c152, %c0_77] : memref<192x64xf32, #tpu.memory_space<vmem>>, vector<8x32xf32>
    %255 = arith.truncf %253 : vector<8x8xf32> to vector<8x8xbf16>
    %256 = arith.truncf %254 : vector<8x32xf32> to vector<8x32xbf16>
    %cst_78 = arith.constant dense<0.000000e+00> : vector<8x32xf32>
    %257 = tpu.matmul %255, %256, %cst_78 {dimension_numbers = #tpu.dot_dimension_numbers<[1], [0], [0], [1], [0, 0, 1, 1], [], []>} : vector<8x8xbf16>, vector<8x32xbf16>, vector<8x32xf32> -> vector<8x32xf32>
    %258 = arith.addf %237, %257 : vector<8x32xf32>
    %c9 = arith.constant 9 : index
    %c0_79 = arith.constant 0 : index
    %259 = vector.load %arg2[%c9, %c0_79] : memref<16x64xf32, #tpu.memory_space<vmem>>, vector<1x32xf32>
    %260 = vector.broadcast %259 : vector<1x32xf32> to vector<8x32xf32>
    %261 = arith.addf %258, %260 : vector<8x32xf32>
    %262 = arith.addf %261, %146 : vector<8x32xf32>
    %cst_80 = arith.constant dense<0.000000e+00> : vector<8xf32>
    %263 = vector.multi_reduction <add>, %262, %cst_80 [1] : vector<8x32xf32> to vector<8xf32>
    %264 = vector.shape_cast %263 : vector<8xf32> to vector<8x1xf32>
    %cst_81 = arith.constant 3.200000e+01 : f32
    %265 = vector.broadcast %cst_81 : f32 to vector<8x1xf32>
    %266 = arith.divf %264, %265 : vector<8x1xf32>
    %267 = arith.mulf %262, %262 : vector<8x32xf32>
    %cst_82 = arith.constant dense<0.000000e+00> : vector<8xf32>
    %268 = vector.multi_reduction <add>, %267, %cst_82 [1] : vector<8x32xf32> to vector<8xf32>
    %269 = vector.shape_cast %268 : vector<8xf32> to vector<8x1xf32>
    %cst_83 = arith.constant 3.200000e+01 : f32
    %270 = vector.broadcast %cst_83 : f32 to vector<8x1xf32>
    %271 = arith.divf %269, %270 : vector<8x1xf32>
    %272 = arith.mulf %266, %266 : vector<8x1xf32>
    %273 = arith.subf %271, %272 : vector<8x1xf32>
    %274 = vector.broadcast %266 : vector<8x1xf32> to vector<8x32xf32>
    %275 = arith.subf %262, %274 : vector<8x32xf32>
    %cst_84 = arith.constant 9.99999974E-6 : f32
    %276 = vector.broadcast %cst_84 : f32 to vector<8x1xf32>
    %277 = arith.addf %273, %276 : vector<8x1xf32>
    %278 = math.rsqrt %277 : vector<8x1xf32>
    %279 = vector.broadcast %278 : vector<8x1xf32> to vector<8x32xf32>
    %280 = arith.mulf %275, %279 : vector<8x32xf32>
    %c10 = arith.constant 10 : index
    %c0_85 = arith.constant 0 : index
    %281 = vector.load %arg2[%c10, %c0_85] : memref<16x64xf32, #tpu.memory_space<vmem>>, vector<1x32xf32>
    %c11 = arith.constant 11 : index
    %c0_86 = arith.constant 0 : index
    %282 = vector.load %arg2[%c11, %c0_86] : memref<16x64xf32, #tpu.memory_space<vmem>>, vector<1x32xf32>
    %283 = vector.broadcast %281 : vector<1x32xf32> to vector<8x32xf32>
    %284 = arith.mulf %280, %283 : vector<8x32xf32>
    %285 = vector.broadcast %282 : vector<1x32xf32> to vector<8x32xf32>
    %286 = arith.addf %284, %285 : vector<8x32xf32>
    %cst_87 = arith.constant 0.000000e+00 : f32
    %287 = vector.broadcast %cst_87 : f32 to vector<8x32xf32>
    %288 = arith.maximumf %286, %287 : vector<8x32xf32>
    %c160 = arith.constant 160 : index
    %c0_88 = arith.constant 0 : index
    %289 = vector.load %arg1[%c160, %c0_88] : memref<192x64xf32, #tpu.memory_space<vmem>>, vector<32x4xf32>
    %290 = arith.truncf %288 : vector<8x32xf32> to vector<8x32xbf16>
    %291 = arith.truncf %289 : vector<32x4xf32> to vector<32x4xbf16>
    %cst_89 = arith.constant dense<0.000000e+00> : vector<8x4xf32>
    %292 = tpu.matmul %290, %291, %cst_89 {dimension_numbers = #tpu.dot_dimension_numbers<[1], [0], [0], [1], [0, 0, 1, 1], [], []>} : vector<8x32xbf16>, vector<32x4xbf16>, vector<8x4xf32> -> vector<8x4xf32>
    %c12 = arith.constant 12 : index
    %c0_90 = arith.constant 0 : index
    %293 = vector.load %arg2[%c12, %c0_90] : memref<16x64xf32, #tpu.memory_space<vmem>>, vector<1x4xf32>
    %294 = vector.broadcast %293 : vector<1x4xf32> to vector<8x4xf32>
    %295 = arith.addf %292, %294 : vector<8x4xf32>
    %cst_91 = arith.constant dense<0xFF800000> : vector<8xf32>
    %296 = vector.multi_reduction <maximumf>, %295, %cst_91 [1] : vector<8x4xf32> to vector<8xf32>
    %297 = vector.shape_cast %296 : vector<8xf32> to vector<8x1xf32>
    %298 = vector.broadcast %297 : vector<8x1xf32> to vector<8x4xf32>
    %299 = arith.subf %295, %298 : vector<8x4xf32>
    %300 = math.exp %299 : vector<8x4xf32>
    %cst_92 = arith.constant dense<0.000000e+00> : vector<8xf32>
    %301 = vector.multi_reduction <add>, %300, %cst_92 [1] : vector<8x4xf32> to vector<8xf32>
    %302 = vector.shape_cast %301 : vector<8xf32> to vector<8x1xf32>
    %303 = math.log %302 : vector<8x1xf32>
    %304 = arith.addf %303, %297 : vector<8x1xf32>
    %305 = vector.broadcast %304 : vector<8x1xf32> to vector<8x4xf32>
    %306 = arith.subf %295, %305 : vector<8x4xf32>
    %c0_93 = arith.constant 0 : index
    %c0_94 = arith.constant 0 : index
    %307 = vector.load %arg3[%c0_93, %c0_94] : memref<8x4xf32, #tpu.memory_space<vmem>>, vector<8x4xf32>
    tpu.vector_store %arg3[%c0_93, %c0_94], %306 {strides = array<i32>} : memref<8x4xf32, #tpu.memory_space<vmem>>, vector<8x4xf32>,
    return
  }
}

</mosaic_0001>

<llo_original>
// kernel: tpu_custom_call.1
$region0: #{tpu_custom_call.1}
  #allocation0 [shape = 'u32[]', space=smem, size = 0x4, offset = 0x4, fixed_abs, tag = 'smem constant byte address 0x4 - core index']
  #allocation1 [shape = 'u32[144,128]{1,0:T(1,128)}', space=vmem, size = 0x12000, scoped, tag = 'internal scratch']
  %s0 = inlined_call_operand.vmem [shape: f32[8,16], index: 0, kind: input, shape index: {}]
  %s1 = inlined_call_operand.vmem [shape: f32[192,64], index: 1, kind: input, shape index: {}]
  %s2 = inlined_call_operand.vmem [shape: f32[16,64], index: 2, kind: input, shape index: {}]
  %s3 = inlined_call_operand.vmem [shape: f32[8,4], index: 3, kind: output, shape index: {}]
  %s4 = sld [smem:[#allocation0]]
  $region22: #{tpu_custom_call.1} parent=0
    _
  %s6 = ssub.s32 1, %s4
  %s7 = scalar_select 0, %s6, %s4
  // Predicated region
  $region2: #{tpu_custom_call.1} parent=0 // pred_check
    _
  $region3: #{tpu_custom_call.1} parent=0 // pred_check_branch
    %9 = sbr.rel (0) target = $region5
  $region4: #{tpu_custom_call.1} parent=0 // pred_region
    _
  $region5: #{tpu_custom_call.1} parent=0 // pred_fallthru
    _
  // Predicated region
  $region6: #{tpu_custom_call.1} parent=0 // pred_check
    _
  $region7: #{tpu_custom_call.1} parent=0 // pred_check_branch
    %11 = sbr.rel (0) target = $region9
  $region8: #{tpu_custom_call.1} parent=0 // pred_region
    _
  $region9: #{tpu_custom_call.1} parent=0 // pred_fallthru
    _
  // Predicated region
  $region10: #{tpu_custom_call.1} parent=0 // pred_check
    _
  $region11: #{tpu_custom_call.1} parent=0 // pred_check_branch
    %13 = sbr.rel (0) target = $region13
  $region12: #{tpu_custom_call.1} parent=0 // pred_region
    _
  $region13: #{tpu_custom_call.1} parent=0 // pred_fallthru
    _
  %v15 = vld [vmem:[%s0] sm:$0xff]
  %v16 = vld [vmem:[%s1] sm:$0xff]
  %v17 = vld [vmem:[%s1 + $0x8] sm:$0xff]
  %v18 = vpack.c.bf16 %v15, %v15
  %v19 = vpack.c.bf16 %v17, %v16
  %vm20 = vcmask 130048
  %v22 = vsel %vm20, %v18, 0
  %24 = vmatprep.subr.bf16.mxu0 0
  %25 = vmatpush1.bf16.msra.mxu0 %v19
  %26 = vmatprep.subr.bf16.mxu0 0
  %27 = vmatpush1.bf16.msra.mxu0 0
  %28 = vmatprep.subr.bf16.mxu0 0
  %29 = vmatpush1.bf16.msra.mxu0 0
  %30 = vmatprep.subr.bf16.mxu0 0
  %31 = vmatpush1.bf16.msra.mxu0 0
  %32 = vmatprep.subr.bf16.mxu0 0
  %33 = vmatpush1.bf16.msra.mxu0 0
  %34 = vmatprep.subr.bf16.mxu0 0
  %35 = vmatpush1.bf16.msra.mxu0 0
  %36 = vmatprep.subr.bf16.mxu0 0
  %37 = vmatpush1.bf16.msra.mxu0 0
  %38 = vmatprep.subr.bf16.mxu0 0
  %39 = vmatpush1.bf16.msra.mxu0 0
  %40 = vmatprep.subr.bf16.mxu0 0
  %41 = vmatpush1.bf16.msra.mxu0 0
  %42 = vmatprep.subr.bf16.mxu0 0
  %43 = vmatpush1.bf16.msra.mxu0 0
  %44 = vmatprep.subr.bf16.mxu0 0
  %45 = vmatpush1.bf16.msra.mxu0 0
  %46 = vmatprep.subr.bf16.mxu0 0
  %47 = vmatpush1.bf16.msra.mxu0 0
  %48 = vmatprep.subr.bf16.mxu0 0
  %49 = vmatpush1.bf16.msra.mxu0 0
  %50 = vmatprep.subr.bf16.mxu0 0
  %51 = vmatpush1.bf16.msra.mxu0 0
  %52 = vmatprep.subr.bf16.mxu0 0
  %53 = vmatpush1.bf16.msra.mxu0 0
  %54 = vmatprep.subr.bf16.mxu0 0
  %55 = vmatpush1.bf16.msra.mxu0 0
  %56 = vmatprep.mubr.bf16.mxu0 0
  %57 = vmatmul.mubr.bf16.gmra.mrb[0].mxu0 %v22
  %v58 = vpop.f32.mrb[0].mxu0
  %v59 = vadd.f32 0.0, %v58
  %v60 = vpop.f32.mrb[0].mxu0
  %v61 = vpop.f32.mrb[0].mxu0
  %v62 = vpop.f32.mrb[0].mxu0
  %63 = vdwg.mxu0
  %v64 = vld [vmem:[%s1 + $0x10] sm:$0xff]
  %v65 = vld [vmem:[%s1 + $0x18] sm:$0xff]
  %v66 = vpack.c.bf16 %v65, %v64
  %v67 = vld [vmem:[%s2] sm:$0x1]
  %v68 = vlaneseq
  %v69 = vshrl.u32 %v68, 7
  %v70 = vsub.s32 0, %v69
  %v71 = vrot.slane %v67, %v70
  %72 = vmatprep.subr.bf16.mxu0 0
  %73 = vmatpush1.bf16.msra.mxu0 %v66
  %74 = vmatprep.subr.bf16.mxu0 0
  %75 = vmatpush1.bf16.msra.mxu0 0
  %76 = vmatprep.subr.bf16.mxu0 0
  %77 = vmatpush1.bf16.msra.mxu0 0
  %78 = vmatprep.subr.bf16.mxu0 0
  %79 = vmatpush1.bf16.msra.mxu0 0
  %80 = vmatprep.subr.bf16.mxu0 0
  %81 = vmatpush1.bf16.msra.mxu0 0
  %82 = vmatprep.subr.bf16.mxu0 0
  %83 = vmatpush1.bf16.msra.mxu0 0
  %84 = vmatprep.subr.bf16.mxu0 0
  %85 = vmatpush1.bf16.msra.mxu0 0
  %86 = vmatprep.subr.bf16.mxu0 0
  %87 = vmatpush1.bf16.msra.mxu0 0
  %88 = vmatprep.subr.bf16.mxu0 0
  %89 = vmatpush1.bf16.msra.mxu0 0
  %90 = vmatprep.subr.bf16.mxu0 0
  %91 = vmatpush1.bf16.msra.mxu0 0
  %92 = vmatprep.subr.bf16.mxu0 0
  %93 = vmatpush1.bf16.msra.mxu0 0
  %94 = vmatprep.subr.bf16.mxu0 0
  %95 = vmatpush1.bf16.msra.mxu0 0
  %96 = vmatprep.subr.bf16.mxu0 0
  %97 = vmatpush1.bf16.msra.mxu0 0
  %98 = vmatprep.subr.bf16.mxu0 0
  %99 = vmatpush1.bf16.msra.mxu0 0
  %100 = vmatprep.subr.bf16.mxu0 0
  %101 = vmatpush1.bf16.msra.mxu0 0
  %102 = vmatprep.subr.bf16.mxu0 0
  %103 = vmatpush1.bf16.msra.mxu0 0
  %104 = vmatprep.mubr.bf16.mxu0 0
  %105 = vmatmul.mubr.bf16.gmra.mrb[0].mxu0 %v22
  %v106 = vpop.f32.mrb[0].mxu0
  %v107 = vadd.f32 %v71, %v106
  %v108 = vpop.f32.mrb[0].mxu0
  %v109 = vpop.f32.mrb[0].mxu0
  %v110 = vpop.f32.mrb[0].mxu0
  %111 = vdwg.mxu0
  %v112 = vld [vmem:[%s1 + $0x20] sm:$0xff]
  %v113 = vpack.c.bf16 %v107, %v107
  %v114 = vpack.c.bf16 %v112, %v112
  %v115 = vld [vmem:[%s2 + $0x1] sm:$0x1]
  %v116 = vlaneseq
  %v117 = vshrl.u32 %v116, 7
  %v118 = vsub.s32 0, %v117
  %v119 = vrot.slane %v115, %v118
  %vm120 = vcmask 64512
  %v122 = vsel %vm120, %v113, 0
  %vm124 = vcmask 1043456
  %v126 = vsel %vm124, %v114, 0
  %128 = vmatprep.subr.bf16.mxu0 0
  %129 = vmatpush1.bf16.msra.mxu0 %v126
  %130 = vmatprep.subr.bf16.mxu0 0
  %131 = vmatpush1.bf16.msra.mxu0 0
  %132 = vmatprep.subr.bf16.mxu0 0
  %133 = vmatpush1.bf16.msra.mxu0 0
  %134 = vmatprep.subr.bf16.mxu0 0
  %135 = vmatpush1.bf16.msra.mxu0 0
  %136 = vmatprep.subr.bf16.mxu0 0
  %137 = vmatpush1.bf16.msra.mxu0 0
  %138 = vmatprep.subr.bf16.mxu0 0
  %139 = vmatpush1.bf16.msra.mxu0 0
  %140 = vmatprep.subr.bf16.mxu0 0
  %141 = vmatpush1.bf16.msra.mxu0 0
  %142 = vmatprep.subr.bf16.mxu0 0
  %143 = vmatpush1.bf16.msra.mxu0 0
  %144 = vmatprep.subr.bf16.mxu0 0
  %145 = vmatpush1.bf16.msra.mxu0 0
  %146 = vmatprep.subr.bf16.mxu0 0
  %147 = vmatpush1.bf16.msra.mxu0 0
  %148 = vmatprep.subr.bf16.mxu0 0
  %149 = vmatpush1.bf16.msra.mxu0 0
  %150 = vmatprep.subr.bf16.mxu0 0
  %151 = vmatpush1.bf16.msra.mxu0 0
  %152 = vmatprep.subr.bf16.mxu0 0
  %153 = vmatpush1.bf16.msra.mxu0 0
  %154 = vmatprep.subr.bf16.mxu0 0
  %155 = vmatpush1.bf16.msra.mxu0 0
  %156 = vmatprep.subr.bf16.mxu0 0
  %157 = vmatpush1.bf16.msra.mxu0 0
  %158 = vmatprep.subr.bf16.mxu0 0
  %159 = vmatpush1.bf16.msra.mxu0 0
  %160 = vmatprep.mubr.bf16.mxu0 0
  %161 = vmatmul.mubr.bf16.gmra.mrb[0].mxu0 %v122
  %v162 = vpop.f32.mrb[0].mxu0
  %v163 = vadd.f32 %v119, %v162
  %v164 = vpop.f32.mrb[0].mxu0
  %v165 = vpop.f32.mrb[0].mxu0
  %v166 = vpop.f32.mrb[0].mxu0
  %167 = vdwg.mxu0
  %v168 = vld [vmem:[%s1 + $0x28] sm:$0xff]
  %v169 = vpack.c.bf16 %v168, %v168
  %v170 = vld [vmem:[%s2 + $0x2] sm:$0x1]
  %v171 = vlaneseq
  %v172 = vshrl.u32 %v171, 7
  %v173 = vsub.s32 0, %v172
  %v174 = vrot.slane %v170, %v173
  %176 = vrot.lane.b32.xlu0 %v113, 120
  %v177 = vpop.permute.xlu0 %176
  %v179 = vsel %vm120, %v177, 0
  %v182 = vsel %vm124, %v169, 0
  %184 = vmatprep.subr.bf16.mxu0 0
  %185 = vmatpush1.bf16.msra.mxu0 %v182
  %186 = vmatprep.subr.bf16.mxu0 0
  %187 = vmatpush1.bf16.msra.mxu0 0
  %188 = vmatprep.subr.bf16.mxu0 0
  %189 = vmatpush1.bf16.msra.mxu0 0
  %190 = vmatprep.subr.bf16.mxu0 0
  %191 = vmatpush1.bf16.msra.mxu0 0
  %192 = vmatprep.subr.bf16.mxu0 0
  %193 = vmatpush1.bf16.msra.mxu0 0
  %194 = vmatprep.subr.bf16.mxu0 0
  %195 = vmatpush1.bf16.msra.mxu0 0
  %196 = vmatprep.subr.bf16.mxu0 0
  %197 = vmatpush1.bf16.msra.mxu0 0
  %198 = vmatprep.subr.bf16.mxu0 0
  %199 = vmatpush1.bf16.msra.mxu0 0
  %200 = vmatprep.subr.bf16.mxu0 0
  %201 = vmatpush1.bf16.msra.mxu0 0
  %202 = vmatprep.subr.bf16.mxu0 0
  %203 = vmatpush1.bf16.msra.mxu0 0
  %204 = vmatprep.subr.bf16.mxu0 0
  %205 = vmatpush1.bf16.msra.mxu0 0
  %206 = vmatprep.subr.bf16.mxu0 0
  %207 = vmatpush1.bf16.msra.mxu0 0
  %208 = vmatprep.subr.bf16.mxu0 0
  %209 = vmatpush1.bf16.msra.mxu0 0
  %210 = vmatprep.subr.bf16.mxu0 0
  %211 = vmatpush1.bf16.msra.mxu0 0
  %212 = vmatprep.subr.bf16.mxu0 0
  %213 = vmatpush1.bf16.msra.mxu0 0
  %214 = vmatprep.subr.bf16.mxu0 0
  %215 = vmatpush1.bf16.msra.mxu0 0
  %216 = vmatprep.mubr.bf16.mxu0 0
  %217 = vmatmul.mubr.bf16.gmra.mrb[0].mxu0 %v179
  %v218 = vpop.f32.mrb[0].mxu0
  %v219 = vadd.f32 %v174, %v218
  %v220 = vpop.f32.mrb[0].mxu0
  %v221 = vpop.f32.mrb[0].mxu0
  %v222 = vpop.f32.mrb[0].mxu0
  %223 = vdwg.mxu0
  %224 = vxpose.xlu0.b32.start [1/16] %v219, 128
  %225 = vxpose.xlu0.b32.cont [2/16] 0.0, 128
  %226 = vxpose.xlu0.b32.cont [3/16] 0.0, 128
  %227 = vxpose.xlu0.b32.cont [4/16] 0.0, 128
  %228 = vxpose.xlu0.b32.cont [5/16] 0.0, 128
  %229 = vxpose.xlu0.b32.cont [6/16] 0.0, 128
  %230 = vxpose.xlu0.b32.cont [7/16] 0.0, 128
  %231 = vxpose.xlu0.b32.cont [8/16] 0.0, 128
  %232 = vxpose.xlu0.b32.cont [9/16] 0.0, 128
  %233 = vxpose.xlu0.b32.cont [10/16] 0.0, 128
  %234 = vxpose.xlu0.b32.cont [11/16] 0.0, 128
  %235 = vxpose.xlu0.b32.cont [12/16] 0.0, 128
  %236 = vxpose.xlu0.b32.cont [13/16] 0.0, 128
  %237 = vxpose.xlu0.b32.cont [14/16] 0.0, 128
  %238 = vxpose.xlu0.b32.cont [15/16] 0.0, 128
  %239 = vxpose.xlu0.b32.end [16/16] 0.0, 128
  %v240 = vpop.trf.xlu0
  %v241 = vpop.trf.xlu0
  %v242 = vpop.trf.xlu0
  %v243 = vpop.trf.xlu0
  %v244 = vpop.trf.xlu0
  %v245 = vpop.trf.xlu0
  %v246 = vpop.trf.xlu0
  %v247 = vpop.trf.xlu0
  %v248 = vpop.trf.xlu0
  %v249 = vpop.trf.xlu0
  %v250 = vpop.trf.xlu0
  %v251 = vpop.trf.xlu0
  %v252 = vpop.trf.xlu0
  %v253 = vpop.trf.xlu0
  %v254 = vpop.trf.xlu0
  %v255 = vpop.trf.xlu0
  %v256 = vpack.c.bf16 %v163, %v163
  %v257 = vpack.c.bf16 %v241, %v240
  %v258 = vpack.c.bf16 %v243, %v242
  %v259 = vpack.c.bf16 %v219, %v219
  %v261 = vsel %vm120, %v256, 0
  %v264 = vsel %vm124, %v257, 0
  %266 = vmatprep.subr.bf16.mxu0 0
  %267 = vmatpush1.bf16.msra.mxu0 %v264
  %268 = vmatprep.subr.bf16.mxu0 0
  %269 = vmatpush1.bf16.msra.mxu0 0
  %270 = vmatprep.subr.bf16.mxu0 0
  %271 = vmatpush1.bf16.msra.mxu0 0
  %272 = vmatprep.subr.bf16.mxu0 0
  %273 = vmatpush1.bf16.msra.mxu0 0
  %274 = vmatprep.subr.bf16.mxu0 0
  %275 = vmatpush1.bf16.msra.mxu0 0
  %276 = vmatprep.subr.bf16.mxu0 0
  %277 = vmatpush1.bf16.msra.mxu0 0
  %278 = vmatprep.subr.bf16.mxu0 0
  %279 = vmatpush1.bf16.msra.mxu0 0
  %280 = vmatprep.subr.bf16.mxu0 0
  %281 = vmatpush1.bf16.msra.mxu0 0
  %282 = vmatprep.subr.bf16.mxu0 0
  %283 = vmatpush1.bf16.msra.mxu0 0
  %284 = vmatprep.subr.bf16.mxu0 0
  %285 = vmatpush1.bf16.msra.mxu0 0
  %286 = vmatprep.subr.bf16.mxu0 0
  %287 = vmatpush1.bf16.msra.mxu0 0
  %288 = vmatprep.subr.bf16.mxu0 0
  %289 = vmatpush1.bf16.msra.mxu0 0
  %290 = vmatprep.subr.bf16.mxu0 0
  %291 = vmatpush1.bf16.msra.mxu0 0
  %292 = vmatprep.subr.bf16.mxu0 0
  %293 = vmatpush1.bf16.msra.mxu0 0
  %294 = vmatprep.subr.bf16.mxu0 0
  %295 = vmatpush1.bf16.msra.mxu0 0
  %296 = vmatprep.subr.bf16.mxu0 0
  %297 = vmatpush1.bf16.msra.mxu0 0
  %298 = vmatprep.mubr.bf16.mxu0 0
  %299 = vmatmul.mubr.bf16.gmra.mrb[0].mxu0 %v261
  %v300 = vpop.f32.mrb[0].mxu0
  %v301 = vadd.f32 0.0, %v300
  %v302 = vpop.f32.mrb[0].mxu0
  %v303 = vpop.f32.mrb[0].mxu0
  %v304 = vpop.f32.mrb[0].mxu0
  %305 = vdwg.mxu0
  %v306 = vsel %vm120, %v301, -inf
  %307 = vmax.xlane.f32.xlu0 %v306
  %v308 = vpop.xlane.xlu0 %307
  %v309 = vsub.f32 %v301, %v308
  %v310 = vmul.f32 %v309, 1.442695
  %v311 = vpow.pop %v310
  %v312 = vsel %vm120, %v311, 0.0
  %313 = vadd.xlane.f32.xlu0 %v312
  %v314 = vpop.xlane.xlu0 %313
  %v315 = vrcp.pop %v314
  %v316 = vmul.f32 %v311, %v315
  %v317 = vpack.c.bf16 %v316, %v316
  %319 = vrot.lane.b32.xlu0 %v259, 96
  %v320 = vpop.permute.xlu0 %319
  %v322 = vsel %vm120, %v317, 0
  %v325 = vsel %vm124, %v320, 0
  %327 = vmatprep.subr.bf16.mxu0 0
  %328 = vmatpush1.bf16.msra.mxu0 %v325
  %329 = vmatprep.subr.bf16.mxu0 0
  %330 = vmatpush1.bf16.msra.mxu0 0
  %331 = vmatprep.subr.bf16.mxu0 0
  %332 = vmatpush1.bf16.msra.mxu0 0
  %333 = vmatprep.subr.bf16.mxu0 0
  %334 = vmatpush1.bf16.msra.mxu0 0
  %335 = vmatprep.subr.bf16.mxu0 0
  %336 = vmatpush1.bf16.msra.mxu0 0
  %337 = vmatprep.subr.bf16.mxu0 0
  %338 = vmatpush1.bf16.msra.mxu0 0
  %339 = vmatprep.subr.bf16.mxu0 0
  %340 = vmatpush1.bf16.msra.mxu0 0
  %341 = vmatprep.subr.bf16.mxu0 0
  %342 = vmatpush1.bf16.msra.mxu0 0
  %343 = vmatprep.subr.bf16.mxu0 0
  %344 = vmatpush1.bf16.msra.mxu0 0
  %345 = vmatprep.subr.bf16.mxu0 0
  %346 = vmatpush1.bf16.msra.mxu0 0
  %347 = vmatprep.subr.bf16.mxu0 0
  %348 = vmatpush1.bf16.msra.mxu0 0
  %349 = vmatprep.subr.bf16.mxu0 0
  %350 = vmatpush1.bf16.msra.mxu0 0
  %351 = vmatprep.subr.bf16.mxu0 0
  %352 = vmatpush1.bf16.msra.mxu0 0
  %353 = vmatprep.subr.bf16.mxu0 0
  %354 = vmatpush1.bf16.msra.mxu0 0
  %355 = vmatprep.subr.bf16.mxu0 0
  %356 = vmatpush1.bf16.msra.mxu0 0
  %357 = vmatprep.subr.bf16.mxu0 0
  %358 = vmatpush1.bf16.msra.mxu0 0
  %359 = vmatprep.mubr.bf16.mxu0 0
  %360 = vmatmul.mubr.bf16.gmra.mrb[0].mxu0 %v322
  %v361 = vpop.f32.mrb[0].mxu0
  %v362 = vadd.f32 0.0, %v361
  %v363 = vpop.f32.mrb[0].mxu0
  %v364 = vpop.f32.mrb[0].mxu0
  %v365 = vpop.f32.mrb[0].mxu0
  %366 = vdwg.mxu0
  %v367 = vld [vmem:[%s1 + $0x30] sm:$0xff]
  %v368 = vpack.c.bf16 %v362, %v362
  %v369 = vpack.c.bf16 %v367, %v367
  %371 = vrot.lane.b32.xlu0 %v256, 120
  %v372 = vpop.permute.xlu0 %371
  %v374 = vrot.slane %v257, 4
  %v376 = vsel %vm120, %v372, 0
  %v379 = vsel %vm124, %v374, 0
  %381 = vmatprep.subr.bf16.mxu0 0
  %382 = vmatpush1.bf16.msra.mxu0 %v379
  %383 = vmatprep.subr.bf16.mxu0 0
  %384 = vmatpush1.bf16.msra.mxu0 0
  %385 = vmatprep.subr.bf16.mxu0 0
  %386 = vmatpush1.bf16.msra.mxu0 0
  %387 = vmatprep.subr.bf16.mxu0 0
  %388 = vmatpush1.bf16.msra.mxu0 0
  %389 = vmatprep.subr.bf16.mxu0 0
  %390 = vmatpush1.bf16.msra.mxu0 0
  %391 = vmatprep.subr.bf16.mxu0 0
  %392 = vmatpush1.bf16.msra.mxu0 0
  %393 = vmatprep.subr.bf16.mxu0 0
  %394 = vmatpush1.bf16.msra.mxu0 0
  %395 = vmatprep.subr.bf16.mxu0 0
  %396 = vmatpush1.bf16.msra.mxu0 0
  %397 = vmatprep.subr.bf16.mxu0 0
  %398 = vmatpush1.bf16.msra.mxu0 0
  %399 = vmatprep.subr.bf16.mxu0 0
  %400 = vmatpush1.bf16.msra.mxu0 0
  %401 = vmatprep.subr.bf16.mxu0 0
  %402 = vmatpush1.bf16.msra.mxu0 0
  %403 = vmatprep.subr.bf16.mxu0 0
  %404 = vmatpush1.bf16.msra.mxu0 0
  %405 = vmatprep.subr.bf16.mxu0 0
  %406 = vmatpush1.bf16.msra.mxu0 0
  %407 = vmatprep.subr.bf16.mxu0 0
  %408 = vmatpush1.bf16.msra.mxu0 0
  %409 = vmatprep.subr.bf16.mxu0 0
  %410 = vmatpush1.bf16.msra.mxu0 0
  %411 = vmatprep.subr.bf16.mxu0 0
  %412 = vmatpush1.bf16.msra.mxu0 0
  %413 = vmatprep.mubr.bf16.mxu0 0
  %414 = vmatmul.mubr.bf16.gmra.mrb[0].mxu0 %v376
  %v415 = vpop.f32.mrb[0].mxu0
  %v416 = vadd.f32 0.0, %v415
  %v417 = vpop.f32.mrb[0].mxu0
  %v418 = vpop.f32.mrb[0].mxu0
  %v419 = vpop.f32.mrb[0].mxu0
  %420 = vdwg.mxu0
  %v421 = vsel %vm120, %v416, -inf
  %422 = vmax.xlane.f32.xlu0 %v421
  %v423 = vpop.xlane.xlu0 %422
  %v424 = vsub.f32 %v416, %v423
  %v425 = vmul.f32 %v424, 1.442695
  %v426 = vpow.pop %v425
  %v427 = vsel %vm120, %v426, 0.0
  %428 = vadd.xlane.f32.xlu0 %v427
  %v429 = vpop.xlane.xlu0 %428
  %v430 = vrcp.pop %v429
  %v431 = vmul.f32 %v426, %v430
  %v432 = vpack.c.bf16 %v431, %v431
  %433 = vrot.lane.b32.xlu0 %v259, 88
  %v434 = vpop.permute.xlu0 %433
  %v436 = vsel %vm120, %v432, 0
  %v439 = vsel %vm124, %v434, 0
  %441 = vmatprep.subr.bf16.mxu0 0
  %442 = vmatpush1.bf16.msra.mxu0 %v439
  %443 = vmatprep.subr.bf16.mxu0 0
  %444 = vmatpush1.bf16.msra.mxu0 0
  %445 = vmatprep.subr.bf16.mxu0 0
  %446 = vmatpush1.bf16.msra.mxu0 0
  %447 = vmatprep.subr.bf16.mxu0 0
  %448 = vmatpush1.bf16.msra.mxu0 0
  %449 = vmatprep.subr.bf16.mxu0 0
  %450 = vmatpush1.bf16.msra.mxu0 0
  %451 = vmatprep.subr.bf16.mxu0 0
  %452 = vmatpush1.bf16.msra.mxu0 0
  %453 = vmatprep.subr.bf16.mxu0 0
  %454 = vmatpush1.bf16.msra.mxu0 0
  %455 = vmatprep.subr.bf16.mxu0 0
  %456 = vmatpush1.bf16.msra.mxu0 0
  %457 = vmatprep.subr.bf16.mxu0 0
  %458 = vmatpush1.bf16.msra.mxu0 0
  %459 = vmatprep.subr.bf16.mxu0 0
  %460 = vmatpush1.bf16.msra.mxu0 0
  %461 = vmatprep.subr.bf16.mxu0 0
  %462 = vmatpush1.bf16.msra.mxu0 0
  %463 = vmatprep.subr.bf16.mxu0 0
  %464 = vmatpush1.bf16.msra.mxu0 0
  %465 = vmatprep.subr.bf16.mxu0 0
  %466 = vmatpush1.bf16.msra.mxu0 0
  %467 = vmatprep.subr.bf16.mxu0 0
  %468 = vmatpush1.bf16.msra.mxu0 0
  %469 = vmatprep.subr.bf16.mxu0 0
  %470 = vmatpush1.bf16.msra.mxu0 0
  %471 = vmatprep.subr.bf16.mxu0 0
  %472 = vmatpush1.bf16.msra.mxu0 0
  %473 = vmatprep.mubr.bf16.mxu0 0
  %474 = vmatmul.mubr.bf16.gmra.mrb[0].mxu0 %v436
  %v475 = vpop.f32.mrb[0].mxu0
  %v476 = vadd.f32 0.0, %v475
  %v477 = vpop.f32.mrb[0].mxu0
  %v478 = vpop.f32.mrb[0].mxu0
  %v479 = vpop.f32.mrb[0].mxu0
  %480 = vdwg.mxu0
  %v481 = vld [vmem:[%s1 + $0x38] sm:$0xff]
  %v482 = vpack.c.bf16 %v476, %v476
  %v483 = vpack.c.bf16 %v481, %v481
  %v485 = vsel %vm120, %v482, 0
  %v488 = vsel %vm124, %v483, 0
  %490 = vmatprep.subr.bf16.mxu0 0
  %491 = vmatpush1.bf16.msra.mxu0 %v488
  %492 = vmatprep.subr.bf16.mxu0 0
  %493 = vmatpush1.bf16.msra.mxu0 0
  %494 = vmatprep.subr.bf16.mxu0 0
  %495 = vmatpush1.bf16.msra.mxu0 0
  %496 = vmatprep.subr.bf16.mxu0 0
  %497 = vmatpush1.bf16.msra.mxu0 0
  %498 = vmatprep.subr.bf16.mxu0 0
  %499 = vmatpush1.bf16.msra.mxu0 0
  %500 = vmatprep.subr.bf16.mxu0 0
  %501 = vmatpush1.bf16.msra.mxu0 0
  %502 = vmatprep.subr.bf16.mxu0 0
  %503 = vmatpush1.bf16.msra.mxu0 0
  %504 = vmatprep.subr.bf16.mxu0 0
  %505 = vmatpush1.bf16.msra.mxu0 0
  %506 = vmatprep.subr.bf16.mxu0 0
  %507 = vmatpush1.bf16.msra.mxu0 0
  %508 = vmatprep.subr.bf16.mxu0 0
  %509 = vmatpush1.bf16.msra.mxu0 0
  %510 = vmatprep.subr.bf16.mxu0 0
  %511 = vmatpush1.bf16.msra.mxu0 0
  %512 = vmatprep.subr.bf16.mxu0 0
  %513 = vmatpush1.bf16.msra.mxu0 0
  %514 = vmatprep.subr.bf16.mxu0 0
  %515 = vmatpush1.bf16.msra.mxu0 0
  %516 = vmatprep.subr.bf16.mxu0 0
  %517 = vmatpush1.bf16.msra.mxu0 0
  %518 = vmatprep.subr.bf16.mxu0 0
  %519 = vmatpush1.bf16.msra.mxu0 0
  %520 = vmatprep.subr.bf16.mxu0 0
  %521 = vmatpush1.bf16.msra.mxu0 0
  %522 = vmatprep.mubr.bf16.mxu0 0
  %523 = vmatmul.mubr.bf16.gmra.mrb[0].mxu0 %v485
  %v524 = vpop.f32.mrb[0].mxu0
  %v525 = vadd.f32 0.0, %v524
  %v526 = vpop.f32.mrb[0].mxu0
  %v527 = vpop.f32.mrb[0].mxu0
  %v528 = vpop.f32.mrb[0].mxu0
  %529 = vdwg.mxu0
  %v531 = vsel %vm120, %v368, 0
  %v534 = vsel %vm124, %v369, 0
  %536 = vmatprep.subr.bf16.mxu0 0
  %537 = vmatpush1.bf16.msra.mxu0 %v534
  %538 = vmatprep.subr.bf16.mxu0 0
  %539 = vmatpush1.bf16.msra.mxu0 0
  %540 = vmatprep.subr.bf16.mxu0 0
  %541 = vmatpush1.bf16.msra.mxu0 0
  %542 = vmatprep.subr.bf16.mxu0 0
  %543 = vmatpush1.bf16.msra.mxu0 0
  %544 = vmatprep.subr.bf16.mxu0 0
  %545 = vmatpush1.bf16.msra.mxu0 0
  %546 = vmatprep.subr.bf16.mxu0 0
  %547 = vmatpush1.bf16.msra.mxu0 0
  %548 = vmatprep.subr.bf16.mxu0 0
  %549 = vmatpush1.bf16.msra.mxu0 0
  %550 = vmatprep.subr.bf16.mxu0 0
  %551 = vmatpush1.bf16.msra.mxu0 0
  %552 = vmatprep.subr.bf16.mxu0 0
  %553 = vmatpush1.bf16.msra.mxu0 0
  %554 = vmatprep.subr.bf16.mxu0 0
  %555 = vmatpush1.bf16.msra.mxu0 0
  %556 = vmatprep.subr.bf16.mxu0 0
  %557 = vmatpush1.bf16.msra.mxu0 0
  %558 = vmatprep.subr.bf16.mxu0 0
  %559 = vmatpush1.bf16.msra.mxu0 0
  %560 = vmatprep.subr.bf16.mxu0 0
  %561 = vmatpush1.bf16.msra.mxu0 0
  %562 = vmatprep.subr.bf16.mxu0 0
  %563 = vmatpush1.bf16.msra.mxu0 0
  %564 = vmatprep.subr.bf16.mxu0 0
  %565 = vmatpush1.bf16.msra.mxu0 0
  %566 = vmatprep.subr.bf16.mxu0 0
  %567 = vmatpush1.bf16.msra.mxu0 0
  %568 = vmatprep.mubr.bf16.mxu0 0
  %569 = vmatmul.mubr.bf16.gmra.mrb[0].mxu0 %v531
  %v570 = vpop.f32.mrb[0].mxu0
  %v571 = vadd.f32 %v525, %v570
  %v572 = vpop.f32.mrb[0].mxu0
  %v573 = vpop.f32.mrb[0].mxu0
  %v574 = vpop.f32.mrb[0].mxu0
  %575 = vdwg.mxu0
  %576 = vrot.lane.b32.xlu0 %v256, 112
  %v577 = vpop.permute.xlu0 %576
  %v579 = vsel %vm120, %v577, 0
  %v582 = vsel %vm124, %v258, 0
  %584 = vmatprep.subr.bf16.mxu0 0
  %585 = vmatpush1.bf16.msra.mxu0 %v582
  %586 = vmatprep.subr.bf16.mxu0 0
  %587 = vmatpush1.bf16.msra.mxu0 0
  %588 = vmatprep.subr.bf16.mxu0 0
  %589 = vmatpush1.bf16.msra.mxu0 0
  %590 = vmatprep.subr.bf16.mxu0 0
  %591 = vmatpush1.bf16.msra.mxu0 0
  %592 = vmatprep.subr.bf16.mxu0 0
  %593 = vmatpush1.bf16.msra.mxu0 0
  %594 = vmatprep.subr.bf16.mxu0 0
  %595 = vmatpush1.bf16.msra.mxu0 0
  %596 = vmatprep.subr.bf16.mxu0 0
  %597 = vmatpush1.bf16.msra.mxu0 0
  %598 = vmatprep.subr.bf16.mxu0 0
  %599 = vmatpush1.bf16.msra.mxu0 0
  %600 = vmatprep.subr.bf16.mxu0 0
  %601 = vmatpush1.bf16.msra.mxu0 0
  %602 = vmatprep.subr.bf16.mxu0 0
  %603 = vmatpush1.bf16.msra.mxu0 0
  %604 = vmatprep.subr.bf16.mxu0 0
  %605 = vmatpush1.bf16.msra.mxu0 0
  %606 = vmatprep.subr.bf16.mxu0 0
  %607 = vmatpush1.bf16.msra.mxu0 0
  %608 = vmatprep.subr.bf16.mxu0 0
  %609 = vmatpush1.bf16.msra.mxu0 0
  %610 = vmatprep.subr.bf16.mxu0 0
  %611 = vmatpush1.bf16.msra.mxu0 0
  %612 = vmatprep.subr.bf16.mxu0 0
  %613 = vmatpush1.bf16.msra.mxu0 0
  %614 = vmatprep.subr.bf16.mxu0 0
  %615 = vmatpush1.bf16.msra.mxu0 0
  %616 = vmatprep.mubr.bf16.mxu0 0
  %617 = vmatmul.mubr.bf16.gmra.mrb[0].mxu0 %v579
  %v618 = vpop.f32.mrb[0].mxu0
  %v619 = vadd.f32 0.0, %v618
  %v620 = vpop.f32.mrb[0].mxu0
  %v621 = vpop.f32.mrb[0].mxu0
  %v622 = vpop.f32.mrb[0].mxu0
  %623 = vdwg.mxu0
  %v624 = vsel %vm120, %v619, -inf
  %625 = vmax.xlane.f32.xlu0 %v624
  %v626 = vpop.xlane.xlu0 %625
  %v627 = vsub.f32 %v619, %v626
  %v628 = vmul.f32 %v627, 1.442695
  %v629 = vpow.pop %v628
  %v630 = vsel %vm120, %v629, 0.0
  %631 = vadd.xlane.f32.xlu0 %v630
  %v632 = vpop.xlane.xlu0 %631
  %v633 = vrcp.pop %v632
  %v634 = vmul.f32 %v629, %v633
  %v635 = vpack.c.bf16 %v634, %v634
  %636 = vrot.lane.b32.xlu0 %v259, 80
  %v637 = vpop.permute.xlu0 %636
  %v639 = vsel %vm120, %v635, 0
  %v642 = vsel %vm124, %v637, 0
  %644 = vmatprep.subr.bf16.mxu0 0
  %645 = vmatpush1.bf16.msra.mxu0 %v642
  %646 = vmatprep.subr.bf16.mxu0 0
  %647 = vmatpush1.bf16.msra.mxu0 0
  %648 = vmatprep.subr.bf16.mxu0 0
  %649 = vmatpush1.bf16.msra.mxu0 0
  %650 = vmatprep.subr.bf16.mxu0 0
  %651 = vmatpush1.bf16.msra.mxu0 0
  %652 = vmatprep.subr.bf16.mxu0 0
  %653 = vmatpush1.bf16.msra.mxu0 0
  %654 = vmatprep.subr.bf16.mxu0 0
  %655 = vmatpush1.bf16.msra.mxu0 0
  %656 = vmatprep.subr.bf16.mxu0 0
  %657 = vmatpush1.bf16.msra.mxu0 0
  %658 = vmatprep.subr.bf16.mxu0 0
  %659 = vmatpush1.bf16.msra.mxu0 0
  %660 = vmatprep.subr.bf16.mxu0 0
  %661 = vmatpush1.bf16.msra.mxu0 0
  %662 = vmatprep.subr.bf16.mxu0 0
  %663 = vmatpush1.bf16.msra.mxu0 0
  %664 = vmatprep.subr.bf16.mxu0 0
  %665 = vmatpush1.bf16.msra.mxu0 0
  %666 = vmatprep.subr.bf16.mxu0 0
  %667 = vmatpush1.bf16.msra.mxu0 0
  %668 = vmatprep.subr.bf16.mxu0 0
  %669 = vmatpush1.bf16.msra.mxu0 0
  %670 = vmatprep.subr.bf16.mxu0 0
  %671 = vmatpush1.bf16.msra.mxu0 0
  %672 = vmatprep.subr.bf16.mxu0 0
  %673 = vmatpush1.bf16.msra.mxu0 0
  %674 = vmatprep.subr.bf16.mxu0 0
  %675 = vmatpush1.bf16.msra.mxu0 0
  %676 = vmatprep.mubr.bf16.mxu0 0
  %677 = vmatmul.mubr.bf16.gmra.mrb[0].mxu0 %v639
  %v678 = vpop.f32.mrb[0].mxu0
  %v679 = vadd.f32 0.0, %v678
  %v680 = vpop.f32.mrb[0].mxu0
  %v681 = vpop.f32.mrb[0].mxu0
  %v682 = vpop.f32.mrb[0].mxu0
  %683 = vdwg.mxu0
  %v684 = vld [vmem:[%s1 + $0x40] sm:$0xff]
  %v685 = vpack.c.bf16 %v679, %v679
  %v686 = vpack.c.bf16 %v684, %v684
  %v688 = vsel %vm120, %v685, 0
  %v691 = vsel %vm124, %v686, 0
  %693 = vmatprep.subr.bf16.mxu0 0
  %694 = vmatpush1.bf16.msra.mxu0 %v691
  %695 = vmatprep.subr.bf16.mxu0 0
  %696 = vmatpush1.bf16.msra.mxu0 0
  %697 = vmatprep.subr.bf16.mxu0 0
  %698 = vmatpush1.bf16.msra.mxu0 0
  %699 = vmatprep.subr.bf16.mxu0 0
  %700 = vmatpush1.bf16.msra.mxu0 0
  %701 = vmatprep.subr.bf16.mxu0 0
  %702 = vmatpush1.bf16.msra.mxu0 0
  %703 = vmatprep.subr.bf16.mxu0 0
  %704 = vmatpush1.bf16.msra.mxu0 0
  %705 = vmatprep.subr.bf16.mxu0 0
  %706 = vmatpush1.bf16.msra.mxu0 0
  %707 = vmatprep.subr.bf16.mxu0 0
  %708 = vmatpush1.bf16.msra.mxu0 0
  %709 = vmatprep.subr.bf16.mxu0 0
  %710 = vmatpush1.bf16.msra.mxu0 0
  %711 = vmatprep.subr.bf16.mxu0 0
  %712 = vmatpush1.bf16.msra.mxu0 0
  %713 = vmatprep.subr.bf16.mxu0 0
  %714 = vmatpush1.bf16.msra.mxu0 0
  %715 = vmatprep.subr.bf16.mxu0 0
  %716 = vmatpush1.bf16.msra.mxu0 0
  %717 = vmatprep.subr.bf16.mxu0 0
  %718 = vmatpush1.bf16.msra.mxu0 0
  %719 = vmatprep.subr.bf16.mxu0 0
  %720 = vmatpush1.bf16.msra.mxu0 0
  %721 = vmatprep.subr.bf16.mxu0 0
  %722 = vmatpush1.bf16.msra.mxu0 0
  %723 = vmatprep.subr.bf16.mxu0 0
  %724 = vmatpush1.bf16.msra.mxu0 0
  %725 = vmatprep.mubr.bf16.mxu0 0
  %726 = vmatmul.mubr.bf16.gmra.mrb[0].mxu0 %v688
  %v727 = vpop.f32.mrb[0].mxu0
  %v728 = vadd.f32 0.0, %v727
  %v729 = vpop.f32.mrb[0].mxu0
  %v730 = vpop.f32.mrb[0].mxu0
  %v731 = vpop.f32.mrb[0].mxu0
  %732 = vdwg.mxu0
  %v733 = vadd.f32 %v571, %v728
  %734 = vrot.lane.b32.xlu0 %v256, 104
  %v735 = vpop.permute.xlu0 %734
  %v737 = vrot.slane %v258, 4
  %v739 = vsel %vm120, %v735, 0
  %v742 = vsel %vm124, %v737, 0
  %744 = vmatprep.subr.bf16.mxu0 0
  %745 = vmatpush1.bf16.msra.mxu0 %v742
  %746 = vmatprep.subr.bf16.mxu0 0
  %747 = vmatpush1.bf16.msra.mxu0 0
  %748 = vmatprep.subr.bf16.mxu0 0
  %749 = vmatpush1.bf16.msra.mxu0 0
  %750 = vmatprep.subr.bf16.mxu0 0
  %751 = vmatpush1.bf16.msra.mxu0 0
  %752 = vmatprep.subr.bf16.mxu0 0
  %753 = vmatpush1.bf16.msra.mxu0 0
  %754 = vmatprep.subr.bf16.mxu0 0
  %755 = vmatpush1.bf16.msra.mxu0 0
  %756 = vmatprep.subr.bf16.mxu0 0
  %757 = vmatpush1.bf16.msra.mxu0 0
  %758 = vmatprep.subr.bf16.mxu0 0
  %759 = vmatpush1.bf16.msra.mxu0 0
  %760 = vmatprep.subr.bf16.mxu0 0
  %761 = vmatpush1.bf16.msra.mxu0 0
  %762 = vmatprep.subr.bf16.mxu0 0
  %763 = vmatpush1.bf16.msra.mxu0 0
  %764 = vmatprep.subr.bf16.mxu0 0
  %765 = vmatpush1.bf16.msra.mxu0 0
  %766 = vmatprep.subr.bf16.mxu0 0
  %767 = vmatpush1.bf16.msra.mxu0 0
  %768 = vmatprep.subr.bf16.mxu0 0
  %769 = vmatpush1.bf16.msra.mxu0 0
  %770 = vmatprep.subr.bf16.mxu0 0
  %771 = vmatpush1.bf16.msra.mxu0 0
  %772 = vmatprep.subr.bf16.mxu0 0
  %773 = vmatpush1.bf16.msra.mxu0 0
  %774 = vmatprep.subr.bf16.mxu0 0
  %775 = vmatpush1.bf16.msra.mxu0 0
  %776 = vmatprep.mubr.bf16.mxu0 0
  %777 = vmatmul.mubr.bf16.gmra.mrb[0].mxu0 %v739
  %v778 = vpop.f32.mrb[0].mxu0
  %v779 = vadd.f32 0.0, %v778
  %v780 = vpop.f32.mrb[0].mxu0
  %v781 = vpop.f32.mrb[0].mxu0
  %v782 = vpop.f32.mrb[0].mxu0
  %783 = vdwg.mxu0
  %v784 = vsel %vm120, %v779, -inf
  %785 = vmax.xlane.f32.xlu0 %v784
  %v786 = vpop.xlane.xlu0 %785
  %v787 = vsub.f32 %v779, %v786
  %v788 = vmul.f32 %v787, 1.442695
  %v789 = vpow.pop %v788
  %v790 = vsel %vm120, %v789, 0.0
  %791 = vadd.xlane.f32.xlu0 %v790
  %v792 = vpop.xlane.xlu0 %791
  %v793 = vrcp.pop %v792
  %v794 = vmul.f32 %v789, %v793
  %v795 = vpack.c.bf16 %v794, %v794
  %796 = vrot.lane.b32.xlu0 %v259, 72
  %v797 = vpop.permute.xlu0 %796
  %v799 = vsel %vm120, %v795, 0
  %v802 = vsel %vm124, %v797, 0
  %804 = vmatprep.subr.bf16.mxu0 0
  %805 = vmatpush1.bf16.msra.mxu0 %v802
  %806 = vmatprep.subr.bf16.mxu0 0
  %807 = vmatpush1.bf16.msra.mxu0 0
  %808 = vmatprep.subr.bf16.mxu0 0
  %809 = vmatpush1.bf16.msra.mxu0 0
  %810 = vmatprep.subr.bf16.mxu0 0
  %811 = vmatpush1.bf16.msra.mxu0 0
  %812 = vmatprep.subr.bf16.mxu0 0
  %813 = vmatpush1.bf16.msra.mxu0 0
  %814 = vmatprep.subr.bf16.mxu0 0
  %815 = vmatpush1.bf16.msra.mxu0 0
  %816 = vmatprep.subr.bf16.mxu0 0
  %817 = vmatpush1.bf16.msra.mxu0 0
  %818 = vmatprep.subr.bf16.mxu0 0
  %819 = vmatpush1.bf16.msra.mxu0 0
  %820 = vmatprep.subr.bf16.mxu0 0
  %821 = vmatpush1.bf16.msra.mxu0 0
  %822 = vmatprep.subr.bf16.mxu0 0
  %823 = vmatpush1.bf16.msra.mxu0 0
  %824 = vmatprep.subr.bf16.mxu0 0
  %825 = vmatpush1.bf16.msra.mxu0 0
  %826 = vmatprep.subr.bf16.mxu0 0
  %827 = vmatpush1.bf16.msra.mxu0 0
  %828 = vmatprep.subr.bf16.mxu0 0
  %829 = vmatpush1.bf16.msra.mxu0 0
  %830 = vmatprep.subr.bf16.mxu0 0
  %831 = vmatpush1.bf16.msra.mxu0 0
  %832 = vmatprep.subr.bf16.mxu0 0
  %833 = vmatpush1.bf16.msra.mxu0 0
  %834 = vmatprep.subr.bf16.mxu0 0
  %835 = vmatpush1.bf16.msra.mxu0 0
  %836 = vmatprep.mubr.bf16.mxu0 0
  %837 = vmatmul.mubr.bf16.gmra.mrb[0].mxu0 %v799
  %v838 = vpop.f32.mrb[0].mxu0
  %v839 = vadd.f32 0.0, %v838
  %v840 = vpop.f32.mrb[0].mxu0
  %v841 = vpop.f32.mrb[0].mxu0
  %v842 = vpop.f32.mrb[0].mxu0
  %843 = vdwg.mxu0
  %v844 = vld [vmem:[%s1 + $0x48] sm:$0xff]
  %v845 = vpack.c.bf16 %v839, %v839
  %v846 = vpack.c.bf16 %v844, %v844
  %v848 = vsel %vm120, %v845, 0
  %v851 = vsel %vm124, %v846, 0
  %853 = vmatprep.subr.bf16.mxu0 0
  %854 = vmatpush1.bf16.msra.mxu0 %v851
  %855 = vmatprep.subr.bf16.mxu0 0
  %856 = vmatpush1.bf16.msra.mxu0 0
  %857 = vmatprep.subr.bf16.mxu0 0
  %858 = vmatpush1.bf16.msra.mxu0 0
  %859 = vmatprep.subr.bf16.mxu0 0
  %860 = vmatpush1.bf16.msra.mxu0 0
  %861 = vmatprep.subr.bf16.mxu0 0
  %862 = vmatpush1.bf16.msra.mxu0 0
  %863 = vmatprep.subr.bf16.mxu0 0
  %864 = vmatpush1.bf16.msra.mxu0 0
  %865 = vmatprep.subr.bf16.mxu0 0
  %866 = vmatpush1.bf16.msra.mxu0 0
  %867 = vmatprep.subr.bf16.mxu0 0
  %868 = vmatpush1.bf16.msra.mxu0 0
  %869 = vmatprep.subr.bf16.mxu0 0
  %870 = vmatpush1.bf16.msra.mxu0 0
  %871 = vmatprep.subr.bf16.mxu0 0
  %872 = vmatpush1.bf16.msra.mxu0 0
  %873 = vmatprep.subr.bf16.mxu0 0
  %874 = vmatpush1.bf16.msra.mxu0 0
  %875 = vmatprep.subr.bf16.mxu0 0
  %876 = vmatpush1.bf16.msra.mxu0 0
  %877 = vmatprep.subr.bf16.mxu0 0
  %878 = vmatpush1.bf16.msra.mxu0 0
  %879 = vmatprep.subr.bf16.mxu0 0
  %880 = vmatpush1.bf16.msra.mxu0 0
  %881 = vmatprep.subr.bf16.mxu0 0
  %882 = vmatpush1.bf16.msra.mxu0 0
  %883 = vmatprep.subr.bf16.mxu0 0
  %884 = vmatpush1.bf16.msra.mxu0 0
  %885 = vmatprep.mubr.bf16.mxu0 0
  %886 = vmatmul.mubr.bf16.gmra.mrb[0].mxu0 %v848
  %v887 = vpop.f32.mrb[0].mxu0
  %v888 = vadd.f32 0.0, %v887
  %v889 = vpop.f32.mrb[0].mxu0
  %v890 = vpop.f32.mrb[0].mxu0
  %v891 = vpop.f32.mrb[0].mxu0
  %892 = vdwg.mxu0
  %v893 = vadd.f32 %v733, %v888
  %v894 = vld [vmem:[%s2 + $0x3] sm:$0x1]
  %v895 = vlaneseq
  %v896 = vshrl.u32 %v895, 7
  %v897 = vsub.s32 0, %v896
  %v898 = vrot.slane %v894, %v897
  %v899 = vadd.f32 %v893, %v898
  %v900 = vadd.f32 %v899, %v59
  %vm901 = vcmask 261120
  %v902 = vsel %vm901, %v900, 0.0
  %903 = vadd.xlane.f32.xlu0 %v902
  %v904 = vpop.xlane.xlu0 %903
  %v905 = vrcp.pop 32.0
  %v906 = vmul.f32 %v904, %v905
  %v907 = vmul.f32 %v900, %v900
  %v908 = vsel %vm901, %v907, 0.0
  %909 = vadd.xlane.f32.xlu0 %v908
  %v910 = vpop.xlane.xlu0 %909
  %v911 = vmul.f32 %v910, %v905
  %v912 = vmul.f32 %v906, %v906
  %v913 = vsub.f32 %v911, %v912
  %v914 = vsub.f32 %v900, %v906
  %v915 = vadd.f32 %v913, 1e-05
  %v916 = vrsqrt.pop %v915
  %v917 = vmul.f32 %v914, %v916
  %v918 = vld [vmem:[%s2 + $0x4] sm:$0x1]
  %v919 = vld [vmem:[%s2 + $0x5] sm:$0x1]
  %v920 = vlaneseq
  %v921 = vshrl.u32 %v920, 7
  %v922 = vsub.s32 0, %v921
  %v923 = vrot.slane %v918, %v922
  %v924 = vmul.f32 %v917, %v923
  %v925 = vlaneseq
  %v926 = vshrl.u32 %v925, 7
  %v927 = vsub.s32 0, %v926
  %v928 = vrot.slane %v919, %v927
  %v929 = vadd.f32 %v924, %v928
  %v930 = vmax.f32 %v929, 0.0
  %v931 = vld [vmem:[%s1 + $0x50] sm:$0xff]
  %v932 = vld [vmem:[%s1 + $0x58] sm:$0xff]
  %v933 = vld [vmem:[%s1 + $0x60] sm:$0xff]
  %v934 = vld [vmem:[%s1 + $0x68] sm:$0xff]
  %v935 = vpack.c.bf16 %v930, %v930
  %v936 = vpack.c.bf16 %v932, %v931
  %v937 = vpack.c.bf16 %v934, %v933
  %v938 = vld [vmem:[%s2 + $0x6] sm:$0x1]
  %v939 = vlaneseq
  %v940 = vshrl.u32 %v939, 7
  %v941 = vsub.s32 0, %v940
  %v942 = vrot.slane %v938, %v941
  %v944 = vsel %vm901, %v935, 0
  %946 = vmatprep.subr.bf16.mxu0 0
  %947 = vmatpush1.bf16.msra.mxu0 %v936
  %948 = vmatprep.subr.bf16.mxu0 0
  %949 = vmatpush1.bf16.msra.mxu0 %v937
  %950 = vmatprep.subr.bf16.mxu0 0
  %951 = vmatpush1.bf16.msra.mxu0 0
  %952 = vmatprep.subr.bf16.mxu0 0
  %953 = vmatpush1.bf16.msra.mxu0 0
  %954 = vmatprep.subr.bf16.mxu0 0
  %955 = vmatpush1.bf16.msra.mxu0 0
  %956 = vmatprep.subr.bf16.mxu0 0
  %957 = vmatpush1.bf16.msra.mxu0 0
  %958 = vmatprep.subr.bf16.mxu0 0
  %959 = vmatpush1.bf16.msra.mxu0 0
  %960 = vmatprep.subr.bf16.mxu0 0
  %961 = vmatpush1.bf16.msra.mxu0 0
  %962 = vmatprep.subr.bf16.mxu0 0
  %963 = vmatpush1.bf16.msra.mxu0 0
  %964 = vmatprep.subr.bf16.mxu0 0
  %965 = vmatpush1.bf16.msra.mxu0 0
  %966 = vmatprep.subr.bf16.mxu0 0
  %967 = vmatpush1.bf16.msra.mxu0 0
  %968 = vmatprep.subr.bf16.mxu0 0
  %969 = vmatpush1.bf16.msra.mxu0 0
  %970 = vmatprep.subr.bf16.mxu0 0
  %971 = vmatpush1.bf16.msra.mxu0 0
  %972 = vmatprep.subr.bf16.mxu0 0
  %973 = vmatpush1.bf16.msra.mxu0 0
  %974 = vmatprep.subr.bf16.mxu0 0
  %975 = vmatpush1.bf16.msra.mxu0 0
  %976 = vmatprep.subr.bf16.mxu0 0
  %977 = vmatpush1.bf16.msra.mxu0 0
  %978 = vmatprep.mubr.bf16.mxu0 0
  %979 = vmatmul.mubr.bf16.gmra.mrb[0].mxu0 %v944
  %v980 = vpop.f32.mrb[0].mxu0
  %v981 = vadd.f32 %v942, %v980
  %v982 = vpop.f32.mrb[0].mxu0
  %v983 = vpop.f32.mrb[0].mxu0
  %v984 = vpop.f32.mrb[0].mxu0
  %985 = vdwg.mxu0
  %v986 = vld [vmem:[%s1 + $0x70] sm:$0xff]
  %v987 = vpack.c.bf16 %v981, %v981
  %v988 = vpack.c.bf16 %v986, %v986
  %v989 = vld [vmem:[%s2 + $0x7] sm:$0x1]
  %v990 = vlaneseq
  %v991 = vshrl.u32 %v990, 7
  %v992 = vsub.s32 0, %v991
  %v993 = vrot.slane %v989, %v992
  %v995 = vsel %vm120, %v987, 0
  %v998 = vsel %vm124, %v988, 0
  %1000 = vmatprep.subr.bf16.mxu0 0
  %1001 = vmatpush1.bf16.msra.mxu0 %v998
  %1002 = vmatprep.subr.bf16.mxu0 0
  %1003 = vmatpush1.bf16.msra.mxu0 0
  %1004 = vmatprep.subr.bf16.mxu0 0
  %1005 = vmatpush1.bf16.msra.mxu0 0
  %1006 = vmatprep.subr.bf16.mxu0 0
  %1007 = vmatpush1.bf16.msra.mxu0 0
  %1008 = vmatprep.subr.bf16.mxu0 0
  %1009 = vmatpush1.bf16.msra.mxu0 0
  %1010 = vmatprep.subr.bf16.mxu0 0
  %1011 = vmatpush1.bf16.msra.mxu0 0
  %1012 = vmatprep.subr.bf16.mxu0 0
  %1013 = vmatpush1.bf16.msra.mxu0 0
  %1014 = vmatprep.subr.bf16.mxu0 0
  %1015 = vmatpush1.bf16.msra.mxu0 0
  %1016 = vmatprep.subr.bf16.mxu0 0
  %1017 = vmatpush1.bf16.msra.mxu0 0
  %1018 = vmatprep.subr.bf16.mxu0 0
  %1019 = vmatpush1.bf16.msra.mxu0 0
  %1020 = vmatprep.subr.bf16.mxu0 0
  %1021 = vmatpush1.bf16.msra.mxu0 0
  %1022 = vmatprep.subr.bf16.mxu0 0
  %1023 = vmatpush1.bf16.msra.mxu0 0
  %1024 = vmatprep.subr.bf16.mxu0 0
  %1025 = vmatpush1.bf16.msra.mxu0 0
  %1026 = vmatprep.subr.bf16.mxu0 0
  %1027 = vmatpush1.bf16.msra.mxu0 0
  %1028 = vmatprep.subr.bf16.mxu0 0
  %1029 = vmatpush1.bf16.msra.mxu0 0
  %1030 = vmatprep.subr.bf16.mxu0 0
  %1031 = vmatpush1.bf16.msra.mxu0 0
  %1032 = vmatprep.mubr.bf16.mxu0 0
  %1033 = vmatmul.mubr.bf16.gmra.mrb[0].mxu0 %v995
  %v1034 = vpop.f32.mrb[0].mxu0
  %v1035 = vadd.f32 %v993, %v1034
  %v1036 = vpop.f32.mrb[0].mxu0
  %v1037 = vpop.f32.mrb[0].mxu0
  %v1038 = vpop.f32.mrb[0].mxu0
  %1039 = vdwg.mxu0
  %v1040 = vld [vmem:[%s1 + $0x78] sm:$0xff]
  %v1041 = vpack.c.bf16 %v1040, %v1040
  %v1042 = vld [vmem:[%s2 + $0x8] sm:$0x1]
  %v1043 = vlaneseq
  %v1044 = vshrl.u32 %v1043, 7
  %v1045 = vsub.s32 0, %v1044
  %v1046 = vrot.slane %v1042, %v1045
  %1048 = vrot.lane.b32.xlu0 %v987, 120
  %v1049 = vpop.permute.xlu0 %1048
  %v1051 = vsel %vm120, %v1049, 0
  %v1054 = vsel %vm124, %v1041, 0
  %1056 = vmatprep.subr.bf16.mxu0 0
  %1057 = vmatpush1.bf16.msra.mxu0 %v1054
  %1058 = vmatprep.subr.bf16.mxu0 0
  %1059 = vmatpush1.bf16.msra.mxu0 0
  %1060 = vmatprep.subr.bf16.mxu0 0
  %1061 = vmatpush1.bf16.msra.mxu0 0
  %1062 = vmatprep.subr.bf16.mxu0 0
  %1063 = vmatpush1.bf16.msra.mxu0 0
  %1064 = vmatprep.subr.bf16.mxu0 0
  %1065 = vmatpush1.bf16.msra.mxu0 0
  %1066 = vmatprep.subr.bf16.mxu0 0
  %1067 = vmatpush1.bf16.msra.mxu0 0
  %1068 = vmatprep.subr.bf16.mxu0 0
  %1069 = vmatpush1.bf16.msra.mxu0 0
  %1070 = vmatprep.subr.bf16.mxu0 0
  %1071 = vmatpush1.bf16.msra.mxu0 0
  %1072 = vmatprep.subr.bf16.mxu0 0
  %1073 = vmatpush1.bf16.msra.mxu0 0
  %1074 = vmatprep.subr.bf16.mxu0 0
  %1075 = vmatpush1.bf16.msra.mxu0 0
  %1076 = vmatprep.subr.bf16.mxu0 0
  %1077 = vmatpush1.bf16.msra.mxu0 0
  %1078 = vmatprep.subr.bf16.mxu0 0
  %1079 = vmatpush1.bf16.msra.mxu0 0
  %1080 = vmatprep.subr.bf16.mxu0 0
  %1081 = vmatpush1.bf16.msra.mxu0 0
  %1082 = vmatprep.subr.bf16.mxu0 0
  %1083 = vmatpush1.bf16.msra.mxu0 0
  %1084 = vmatprep.subr.bf16.mxu0 0
  %1085 = vmatpush1.bf16.msra.mxu0 0
  %1086 = vmatprep.subr.bf16.mxu0 0
  %1087 = vmatpush1.bf16.msra.mxu0 0
  %1088 = vmatprep.mubr.bf16.mxu0 0
  %1089 = vmatmul.mubr.bf16.gmra.mrb[0].mxu0 %v1051
  %v1090 = vpop.f32.mrb[0].mxu0
  %v1091 = vadd.f32 %v1046, %v1090
  %v1092 = vpop.f32.mrb[0].mxu0
  %v1093 = vpop.f32.mrb[0].mxu0
  %v1094 = vpop.f32.mrb[0].mxu0
  %1095 = vdwg.mxu0
  %1096 = vxpose.xlu0.b32.start [1/16] %v1091, 128
  %1097 = vxpose.xlu0.b32.cont [2/16] 0.0, 128
  %1098 = vxpose.xlu0.b32.cont [3/16] 0.0, 128
  %1099 = vxpose.xlu0.b32.cont [4/16] 0.0, 128
  %1100 = vxpose.xlu0.b32.cont [5/16] 0.0, 128
  %1101 = vxpose.xlu0.b32.cont [6/16] 0.0, 128
  %1102 = vxpose.xlu0.b32.cont [7/16] 0.0, 128
  %1103 = vxpose.xlu0.b32.cont [8/16] 0.0, 128
  %1104 = vxpose.xlu0.b32.cont [9/16] 0.0, 128
  %1105 = vxpose.xlu0.b32.cont [10/16] 0.0, 128
  %1106 = vxpose.xlu0.b32.cont [11/16] 0.0, 128
  %1107 = vxpose.xlu0.b32.cont [12/16] 0.0, 128
  %1108 = vxpose.xlu0.b32.cont [13/16] 0.0, 128
  %1109 = vxpose.xlu0.b32.cont [14/16] 0.0, 128
  %1110 = vxpose.xlu0.b32.cont [15/16] 0.0, 128
  %1111 = vxpose.xlu0.b32.end [16/16] 0.0, 128
  %v1112 = vpop.trf.xlu0
  %v1113 = vpop.trf.xlu0
  %v1114 = vpop.trf.xlu0
  %v1115 = vpop.trf.xlu0
  %v1116 = vpop.trf.xlu0
  %v1117 = vpop.trf.xlu0
  %v1118 = vpop.trf.xlu0
  %v1119 = vpop.trf.xlu0
  %v1120 = vpop.trf.xlu0
  %v1121 = vpop.trf.xlu0
  %v1122 = vpop.trf.xlu0
  %v1123 = vpop.trf.xlu0
  %v1124 = vpop.trf.xlu0
  %v1125 = vpop.trf.xlu0
  %v1126 = vpop.trf.xlu0
  %v1127 = vpop.trf.xlu0
  %v1128 = vpack.c.bf16 %v1035, %v1035
  %v1129 = vpack.c.bf16 %v1113, %v1112
  %v1130 = vpack.c.bf16 %v1115, %v1114
  %v1131 = vpack.c.bf16 %v1091, %v1091
  %v1133 = vsel %vm120, %v1128, 0
  %v1136 = vsel %vm124, %v1129, 0
  %1138 = vmatprep.subr.bf16.mxu0 0
  %1139 = vmatpush1.bf16.msra.mxu0 %v1136
  %1140 = vmatprep.subr.bf16.mxu0 0
  %1141 = vmatpush1.bf16.msra.mxu0 0
  %1142 = vmatprep.subr.bf16.mxu0 0
  %1143 = vmatpush1.bf16.msra.mxu0 0
  %1144 = vmatprep.subr.bf16.mxu0 0
  %1145 = vmatpush1.bf16.msra.mxu0 0
  %1146 = vmatprep.subr.bf16.mxu0 0
  %1147 = vmatpush1.bf16.msra.mxu0 0
  %1148 = vmatprep.subr.bf16.mxu0 0
  %1149 = vmatpush1.bf16.msra.mxu0 0
  %1150 = vmatprep.subr.bf16.mxu0 0
  %1151 = vmatpush1.bf16.msra.mxu0 0
  %1152 = vmatprep.subr.bf16.mxu0 0
  %1153 = vmatpush1.bf16.msra.mxu0 0
  %1154 = vmatprep.subr.bf16.mxu0 0
  %1155 = vmatpush1.bf16.msra.mxu0 0
  %1156 = vmatprep.subr.bf16.mxu0 0
  %1157 = vmatpush1.bf16.msra.mxu0 0
  %1158 = vmatprep.subr.bf16.mxu0 0
  %1159 = vmatpush1.bf16.msra.mxu0 0
  %1160 = vmatprep.subr.bf16.mxu0 0
  %1161 = vmatpush1.bf16.msra.mxu0 0
  %1162 = vmatprep.subr.bf16.mxu0 0
  %1163 = vmatpush1.bf16.msra.mxu0 0
  %1164 = vmatprep.subr.bf16.mxu0 0
  %1165 = vmatpush1.bf16.msra.mxu0 0
  %1166 = vmatprep.subr.bf16.mxu0 0
  %1167 = vmatpush1.bf16.msra.mxu0 0
  %1168 = vmatprep.subr.bf16.mxu0 0
  %1169 = vmatpush1.bf16.msra.mxu0 0
  %1170 = vmatprep.mubr.bf16.mxu0 0
  %1171 = vmatmul.mubr.bf16.gmra.mrb[0].mxu0 %v1133
  %v1172 = vpop.f32.mrb[0].mxu0
  %v1173 = vadd.f32 0.0, %v1172
  %v1174 = vpop.f32.mrb[0].mxu0
  %v1175 = vpop.f32.mrb[0].mxu0
  %v1176 = vpop.f32.mrb[0].mxu0
  %1177 = vdwg.mxu0
  %v1178 = vsel %vm120, %v1173, -inf
  %1179 = vmax.xlane.f32.xlu0 %v1178
  %v1180 = vpop.xlane.xlu0 %1179
  %v1181 = vsub.f32 %v1173, %v1180
  %v1182 = vmul.f32 %v1181, 1.442695
  %v1183 = vpow.pop %v1182
  %v1184 = vsel %vm120, %v1183, 0.0
  %1185 = vadd.xlane.f32.xlu0 %v1184
  %v1186 = vpop.xlane.xlu0 %1185
  %v1187 = vrcp.pop %v1186
  %v1188 = vmul.f32 %v1183, %v1187
  %v1189 = vpack.c.bf16 %v1188, %v1188
  %1191 = vrot.lane.b32.xlu0 %v1131, 96
  %v1192 = vpop.permute.xlu0 %1191
  %v1194 = vsel %vm120, %v1189, 0
  %v1197 = vsel %vm124, %v1192, 0
  %1199 = vmatprep.subr.bf16.mxu0 0
  %1200 = vmatpush1.bf16.msra.mxu0 %v1197
  %1201 = vmatprep.subr.bf16.mxu0 0
  %1202 = vmatpush1.bf16.msra.mxu0 0
  %1203 = vmatprep.subr.bf16.mxu0 0
  %1204 = vmatpush1.bf16.msra.mxu0 0
  %1205 = vmatprep.subr.bf16.mxu0 0
  %1206 = vmatpush1.bf16.msra.mxu0 0
  %1207 = vmatprep.subr.bf16.mxu0 0
  %1208 = vmatpush1.bf16.msra.mxu0 0
  %1209 = vmatprep.subr.bf16.mxu0 0
  %1210 = vmatpush1.bf16.msra.mxu0 0
  %1211 = vmatprep.subr.bf16.mxu0 0
  %1212 = vmatpush1.bf16.msra.mxu0 0
  %1213 = vmatprep.subr.bf16.mxu0 0
  %1214 = vmatpush1.bf16.msra.mxu0 0
  %1215 = vmatprep.subr.bf16.mxu0 0
  %1216 = vmatpush1.bf16.msra.mxu0 0
  %1217 = vmatprep.subr.bf16.mxu0 0
  %1218 = vmatpush1.bf16.msra.mxu0 0
  %1219 = vmatprep.subr.bf16.mxu0 0
  %1220 = vmatpush1.bf16.msra.mxu0 0
  %1221 = vmatprep.subr.bf16.mxu0 0
  %1222 = vmatpush1.bf16.msra.mxu0 0
  %1223 = vmatprep.subr.bf16.mxu0 0
  %1224 = vmatpush1.bf16.msra.mxu0 0
  %1225 = vmatprep.subr.bf16.mxu0 0
  %1226 = vmatpush1.bf16.msra.mxu0 0
  %1227 = vmatprep.subr.bf16.mxu0 0
  %1228 = vmatpush1.bf16.msra.mxu0 0
  %1229 = vmatprep.subr.bf16.mxu0 0
  %1230 = vmatpush1.bf16.msra.mxu0 0
  %1231 = vmatprep.mubr.bf16.mxu0 0
  %1232 = vmatmul.mubr.bf16.gmra.mrb[0].mxu0 %v1194
  %v1233 = vpop.f32.mrb[0].mxu0
  %v1234 = vadd.f32 0.0, %v1233
  %v1235 = vpop.f32.mrb[0].mxu0
  %v1236 = vpop.f32.mrb[0].mxu0
  %v1237 = vpop.f32.mrb[0].mxu0
  %1238 = vdwg.mxu0
  %v1239 = vld [vmem:[%s1 + $0x80] sm:$0xff]
  %v1240 = vpack.c.bf16 %v1234, %v1234
  %v1241 = vpack.c.bf16 %v1239, %v1239
  %1243 = vrot.lane.b32.xlu0 %v1128, 120
  %v1244 = vpop.permute.xlu0 %1243
  %v1246 = vrot.slane %v1129, 4
  %v1248 = vsel %vm120, %v1244, 0
  %v1251 = vsel %vm124, %v1246, 0
  %1253 = vmatprep.subr.bf16.mxu0 0
  %1254 = vmatpush1.bf16.msra.mxu0 %v1251
  %1255 = vmatprep.subr.bf16.mxu0 0
  %1256 = vmatpush1.bf16.msra.mxu0 0
  %1257 = vmatprep.subr.bf16.mxu0 0
  %1258 = vmatpush1.bf16.msra.mxu0 0
  %1259 = vmatprep.subr.bf16.mxu0 0
  %1260 = vmatpush1.bf16.msra.mxu0 0
  %1261 = vmatprep.subr.bf16.mxu0 0
  %1262 = vmatpush1.bf16.msra.mxu0 0
  %1263 = vmatprep.subr.bf16.mxu0 0
  %1264 = vmatpush1.bf16.msra.mxu0 0
  %1265 = vmatprep.subr.bf16.mxu0 0
  %1266 = vmatpush1.bf16.msra.mxu0 0
  %1267 = vmatprep.subr.bf16.mxu0 0
  %1268 = vmatpush1.bf16.msra.mxu0 0
  %1269 = vmatprep.subr.bf16.mxu0 0
  %1270 = vmatpush1.bf16.msra.mxu0 0
  %1271 = vmatprep.subr.bf16.mxu0 0
  %1272 = vmatpush1.bf16.msra.mxu0 0
  %1273 = vmatprep.subr.bf16.mxu0 0
  %1274 = vmatpush1.bf16.msra.mxu0 0
  %1275 = vmatprep.subr.bf16.mxu0 0
  %1276 = vmatpush1.bf16.msra.mxu0 0
  %1277 = vmatprep.subr.bf16.mxu0 0
  %1278 = vmatpush1.bf16.msra.mxu0 0
  %1279 = vmatprep.subr.bf16.mxu0 0
  %1280 = vmatpush1.bf16.msra.mxu0 0
  %1281 = vmatprep.subr.bf16.mxu0 0
  %1282 = vmatpush1.bf16.msra.mxu0 0
  %1283 = vmatprep.subr.bf16.mxu0 0
  %1284 = vmatpush1.bf16.msra.mxu0 0
  %1285 = vmatprep.mubr.bf16.mxu0 0
  %1286 = vmatmul.mubr.bf16.gmra.mrb[0].mxu0 %v1248
  %v1287 = vpop.f32.mrb[0].mxu0
  %v1288 = vadd.f32 0.0, %v1287
  %v1289 = vpop.f32.mrb[0].mxu0
  %v1290 = vpop.f32.mrb[0].mxu0
  %v1291 = vpop.f32.mrb[0].mxu0
  %1292 = vdwg.mxu0
  %v1293 = vsel %vm120, %v1288, -inf
  %1294 = vmax.xlane.f32.xlu0 %v1293
  %v1295 = vpop.xlane.xlu0 %1294
  %v1296 = vsub.f32 %v1288, %v1295
  %v1297 = vmul.f32 %v1296, 1.442695
  %v1298 = vpow.pop %v1297
  %v1299 = vsel %vm120, %v1298, 0.0
  %1300 = vadd.xlane.f32.xlu0 %v1299
  %v1301 = vpop.xlane.xlu0 %1300
  %v1302 = vrcp.pop %v1301
  %v1303 = vmul.f32 %v1298, %v1302
  %v1304 = vpack.c.bf16 %v1303, %v1303
  %1305 = vrot.lane.b32.xlu0 %v1131, 88
  %v1306 = vpop.permute.xlu0 %1305
  %v1308 = vsel %vm120, %v1304, 0
  %v1311 = vsel %vm124, %v1306, 0
  %1313 = vmatprep.subr.bf16.mxu0 0
  %1314 = vmatpush1.bf16.msra.mxu0 %v1311
  %1315 = vmatprep.subr.bf16.mxu0 0
  %1316 = vmatpush1.bf16.msra.mxu0 0
  %1317 = vmatprep.subr.bf16.mxu0 0
  %1318 = vmatpush1.bf16.msra.mxu0 0
  %1319 = vmatprep.subr.bf16.mxu0 0
  %1320 = vmatpush1.bf16.msra.mxu0 0
  %1321 = vmatprep.subr.bf16.mxu0 0
  %1322 = vmatpush1.bf16.msra.mxu0 0
  %1323 = vmatprep.subr.bf16.mxu0 0
  %1324 = vmatpush1.bf16.msra.mxu0 0
  %1325 = vmatprep.subr.bf16.mxu0 0
  %1326 = vmatpush1.bf16.msra.mxu0 0
  %1327 = vmatprep.subr.bf16.mxu0 0
  %1328 = vmatpush1.bf16.msra.mxu0 0
  %1329 = vmatprep.subr.bf16.mxu0 0
  %1330 = vmatpush1.bf16.msra.mxu0 0
  %1331 = vmatprep.subr.bf16.mxu0 0
  %1332 = vmatpush1.bf16.msra.mxu0 0
  %1333 = vmatprep.subr.bf16.mxu0 0
  %1334 = vmatpush1.bf16.msra.mxu0 0
  %1335 = vmatprep.subr.bf16.mxu0 0
  %1336 = vmatpush1.bf16.msra.mxu0 0
  %1337 = vmatprep.subr.bf16.mxu0 0
  %1338 = vmatpush1.bf16.msra.mxu0 0
  %1339 = vmatprep.subr.bf16.mxu0 0
  %1340 = vmatpush1.bf16.msra.mxu0 0
  %1341 = vmatprep.subr.bf16.mxu0 0
  %1342 = vmatpush1.bf16.msra.mxu0 0
  %1343 = vmatprep.subr.bf16.mxu0 0
  %1344 = vmatpush1.bf16.msra.mxu0 0
  %1345 = vmatprep.mubr.bf16.mxu0 0
  %1346 = vmatmul.mubr.bf16.gmra.mrb[0].mxu0 %v1308
  %v1347 = vpop.f32.mrb[0].mxu0
  %v1348 = vadd.f32 0.0, %v1347
  %v1349 = vpop.f32.mrb[0].mxu0
  %v1350 = vpop.f32.mrb[0].mxu0
  %v1351 = vpop.f32.mrb[0].mxu0
  %1352 = vdwg.mxu0
  %v1353 = vld [vmem:[%s1 + $0x88] sm:$0xff]
  %v1354 = vpack.c.bf16 %v1348, %v1348
  %v1355 = vpack.c.bf16 %v1353, %v1353
  %v1357 = vsel %vm120, %v1354, 0
  %v1360 = vsel %vm124, %v1355, 0
  %1362 = vmatprep.subr.bf16.mxu0 0
  %1363 = vmatpush1.bf16.msra.mxu0 %v1360
  %1364 = vmatprep.subr.bf16.mxu0 0
  %1365 = vmatpush1.bf16.msra.mxu0 0
  %1366 = vmatprep.subr.bf16.mxu0 0
  %1367 = vmatpush1.bf16.msra.mxu0 0
  %1368 = vmatprep.subr.bf16.mxu0 0
  %1369 = vmatpush1.bf16.msra.mxu0 0
  %1370 = vmatprep.subr.bf16.mxu0 0
  %1371 = vmatpush1.bf16.msra.mxu0 0
  %1372 = vmatprep.subr.bf16.mxu0 0
  %1373 = vmatpush1.bf16.msra.mxu0 0
  %1374 = vmatprep.subr.bf16.mxu0 0
  %1375 = vmatpush1.bf16.msra.mxu0 0
  %1376 = vmatprep.subr.bf16.mxu0 0
  %1377 = vmatpush1.bf16.msra.mxu0 0
  %1378 = vmatprep.subr.bf16.mxu0 0
  %1379 = vmatpush1.bf16.msra.mxu0 0
  %1380 = vmatprep.subr.bf16.mxu0 0
  %1381 = vmatpush1.bf16.msra.mxu0 0
  %1382 = vmatprep.subr.bf16.mxu0 0
  %1383 = vmatpush1.bf16.msra.mxu0 0
  %1384 = vmatprep.subr.bf16.mxu0 0
  %1385 = vmatpush1.bf16.msra.mxu0 0
  %1386 = vmatprep.subr.bf16.mxu0 0
  %1387 = vmatpush1.bf16.msra.mxu0 0
  %1388 = vmatprep.subr.bf16.mxu0 0
  %1389 = vmatpush1.bf16.msra.mxu0 0
  %1390 = vmatprep.subr.bf16.mxu0 0
  %1391 = vmatpush1.bf16.msra.mxu0 0
  %1392 = vmatprep.subr.bf16.mxu0 0
  %1393 = vmatpush1.bf16.msra.mxu0 0
  %1394 = vmatprep.mubr.bf16.mxu0 0
  %1395 = vmatmul.mubr.bf16.gmra.mrb[0].mxu0 %v1357
  %v1396 = vpop.f32.mrb[0].mxu0
  %v1397 = vadd.f32 0.0, %v1396
  %v1398 = vpop.f32.mrb[0].mxu0
  %v1399 = vpop.f32.mrb[0].mxu0
  %v1400 = vpop.f32.mrb[0].mxu0
  %1401 = vdwg.mxu0
  %v1403 = vsel %vm120, %v1240, 0
  %v1406 = vsel %vm124, %v1241, 0
  %1408 = vmatprep.subr.bf16.mxu0 0
  %1409 = vmatpush1.bf16.msra.mxu0 %v1406
  %1410 = vmatprep.subr.bf16.mxu0 0
  %1411 = vmatpush1.bf16.msra.mxu0 0
  %1412 = vmatprep.subr.bf16.mxu0 0
  %1413 = vmatpush1.bf16.msra.mxu0 0
  %1414 = vmatprep.subr.bf16.mxu0 0
  %1415 = vmatpush1.bf16.msra.mxu0 0
  %1416 = vmatprep.subr.bf16.mxu0 0
  %1417 = vmatpush1.bf16.msra.mxu0 0
  %1418 = vmatprep.subr.bf16.mxu0 0
  %1419 = vmatpush1.bf16.msra.mxu0 0
  %1420 = vmatprep.subr.bf16.mxu0 0
  %1421 = vmatpush1.bf16.msra.mxu0 0
  %1422 = vmatprep.subr.bf16.mxu0 0
  %1423 = vmatpush1.bf16.msra.mxu0 0
  %1424 = vmatprep.subr.bf16.mxu0 0
  %1425 = vmatpush1.bf16.msra.mxu0 0
  %1426 = vmatprep.subr.bf16.mxu0 0
  %1427 = vmatpush1.bf16.msra.mxu0 0
  %1428 = vmatprep.subr.bf16.mxu0 0
  %1429 = vmatpush1.bf16.msra.mxu0 0
  %1430 = vmatprep.subr.bf16.mxu0 0
  %1431 = vmatpush1.bf16.msra.mxu0 0
  %1432 = vmatprep.subr.bf16.mxu0 0
  %1433 = vmatpush1.bf16.msra.mxu0 0
  %1434 = vmatprep.subr.bf16.mxu0 0
  %1435 = vmatpush1.bf16.msra.mxu0 0
  %1436 = vmatprep.subr.bf16.mxu0 0
  %1437 = vmatpush1.bf16.msra.mxu0 0
  %1438 = vmatprep.subr.bf16.mxu0 0
  %1439 = vmatpush1.bf16.msra.mxu0 0
  %1440 = vmatprep.mubr.bf16.mxu0 0
  %1441 = vmatmul.mubr.bf16.gmra.mrb[0].mxu0 %v1403
  %v1442 = vpop.f32.mrb[0].mxu0
  %v1443 = vadd.f32 %v1397, %v1442
  %v1444 = vpop.f32.mrb[0].mxu0
  %v1445 = vpop.f32.mrb[0].mxu0
  %v1446 = vpop.f32.mrb[0].mxu0
  %1447 = vdwg.mxu0
  %1448 = vrot.lane.b32.xlu0 %v1128, 112
  %v1449 = vpop.permute.xlu0 %1448
  %v1451 = vsel %vm120, %v1449, 0
  %v1454 = vsel %vm124, %v1130, 0
  %1456 = vmatprep.subr.bf16.mxu0 0
  %1457 = vmatpush1.bf16.msra.mxu0 %v1454
  %1458 = vmatprep.subr.bf16.mxu0 0
  %1459 = vmatpush1.bf16.msra.mxu0 0
  %1460 = vmatprep.subr.bf16.mxu0 0
  %1461 = vmatpush1.bf16.msra.mxu0 0
  %1462 = vmatprep.subr.bf16.mxu0 0
  %1463 = vmatpush1.bf16.msra.mxu0 0
  %1464 = vmatprep.subr.bf16.mxu0 0
  %1465 = vmatpush1.bf16.msra.mxu0 0
  %1466 = vmatprep.subr.bf16.mxu0 0
  %1467 = vmatpush1.bf16.msra.mxu0 0
  %1468 = vmatprep.subr.bf16.mxu0 0
  %1469 = vmatpush1.bf16.msra.mxu0 0
  %1470 = vmatprep.subr.bf16.mxu0 0
  %1471 = vmatpush1.bf16.msra.mxu0 0
  %1472 = vmatprep.subr.bf16.mxu0 0
  %1473 = vmatpush1.bf16.msra.mxu0 0
  %1474 = vmatprep.subr.bf16.mxu0 0
  %1475 = vmatpush1.bf16.msra.mxu0 0
  %1476 = vmatprep.subr.bf16.mxu0 0
  %1477 = vmatpush1.bf16.msra.mxu0 0
  %1478 = vmatprep.subr.bf16.mxu0 0
  %1479 = vmatpush1.bf16.msra.mxu0 0
  %1480 = vmatprep.subr.bf16.mxu0 0
  %1481 = vmatpush1.bf16.msra.mxu0 0
  %1482 = vmatprep.subr.bf16.mxu0 0
  %1483 = vmatpush1.bf16.msra.mxu0 0
  %1484 = vmatprep.subr.bf16.mxu0 0
  %1485 = vmatpush1.bf16.msra.mxu0 0
  %1486 = vmatprep.subr.bf16.mxu0 0
  %1487 = vmatpush1.bf16.msra.mxu0 0
  %1488 = vmatprep.mubr.bf16.mxu0 0
  %1489 = vmatmul.mubr.bf16.gmra.mrb[0].mxu0 %v1451
  %v1490 = vpop.f32.mrb[0].mxu0
  %v1491 = vadd.f32 0.0, %v1490
  %v1492 = vpop.f32.mrb[0].mxu0
  %v1493 = vpop.f32.mrb[0].mxu0
  %v1494 = vpop.f32.mrb[0].mxu0
  %1495 = vdwg.mxu0
  %v1496 = vsel %vm120, %v1491, -inf
  %1497 = vmax.xlane.f32.xlu0 %v1496
  %v1498 = vpop.xlane.xlu0 %1497
  %v1499 = vsub.f32 %v1491, %v1498
  %v1500 = vmul.f32 %v1499, 1.442695
  %v1501 = vpow.pop %v1500
  %v1502 = vsel %vm120, %v1501, 0.0
  %1503 = vadd.xlane.f32.xlu0 %v1502
  %v1504 = vpop.xlane.xlu0 %1503
  %v1505 = vrcp.pop %v1504
  %v1506 = vmul.f32 %v1501, %v1505
  %v1507 = vpack.c.bf16 %v1506, %v1506
  %1508 = vrot.lane.b32.xlu0 %v1131, 80
  %v1509 = vpop.permute.xlu0 %1508
  %v1511 = vsel %vm120, %v1507, 0
  %v1514 = vsel %vm124, %v1509, 0
  %1516 = vmatprep.subr.bf16.mxu0 0
  %1517 = vmatpush1.bf16.msra.mxu0 %v1514
  %1518 = vmatprep.subr.bf16.mxu0 0
  %1519 = vmatpush1.bf16.msra.mxu0 0
  %1520 = vmatprep.subr.bf16.mxu0 0
  %1521 = vmatpush1.bf16.msra.mxu0 0
  %1522 = vmatprep.subr.bf16.mxu0 0
  %1523 = vmatpush1.bf16.msra.mxu0 0
  %1524 = vmatprep.subr.bf16.mxu0 0
  %1525 = vmatpush1.bf16.msra.mxu0 0
  %1526 = vmatprep.subr.bf16.mxu0 0
  %1527 = vmatpush1.bf16.msra.mxu0 0
  %1528 = vmatprep.subr.bf16.mxu0 0
  %1529 = vmatpush1.bf16.msra.mxu0 0
  %1530 = vmatprep.subr.bf16.mxu0 0
  %1531 = vmatpush1.bf16.msra.mxu0 0
  %1532 = vmatprep.subr.bf16.mxu0 0
  %1533 = vmatpush1.bf16.msra.mxu0 0
  %1534 = vmatprep.subr.bf16.mxu0 0
  %1535 = vmatpush1.bf16.msra.mxu0 0
  %1536 = vmatprep.subr.bf16.mxu0 0
  %1537 = vmatpush1.bf16.msra.mxu0 0
  %1538 = vmatprep.subr.bf16.mxu0 0
  %1539 = vmatpush1.bf16.msra.mxu0 0
  %1540 = vmatprep.subr.bf16.mxu0 0
  %1541 = vmatpush1.bf16.msra.mxu0 0
  %1542 = vmatprep.subr.bf16.mxu0 0
  %1543 = vmatpush1.bf16.msra.mxu0 0
  %1544 = vmatprep.subr.bf16.mxu0 0
  %1545 = vmatpush1.bf16.msra.mxu0 0
  %1546 = vmatprep.subr.bf16.mxu0 0
  %1547 = vmatpush1.bf16.msra.mxu0 0
  %1548 = vmatprep.mubr.bf16.mxu0 0
  %1549 = vmatmul.mubr.bf16.gmra.mrb[0].mxu0 %v1511
  %v1550 = vpop.f32.mrb[0].mxu0
  %v1551 = vadd.f32 0.0, %v1550
  %v1552 = vpop.f32.mrb[0].mxu0
  %v1553 = vpop.f32.mrb[0].mxu0
  %v1554 = vpop.f32.mrb[0].mxu0
  %1555 = vdwg.mxu0
  %v1556 = vld [vmem:[%s1 + $0x90] sm:$0xff]
  %v1557 = vpack.c.bf16 %v1551, %v1551
  %v1558 = vpack.c.bf16 %v1556, %v1556
  %v1560 = vsel %vm120, %v1557, 0
  %v1563 = vsel %vm124, %v1558, 0
  %1565 = vmatprep.subr.bf16.mxu0 0
  %1566 = vmatpush1.bf16.msra.mxu0 %v1563
  %1567 = vmatprep.subr.bf16.mxu0 0
  %1568 = vmatpush1.bf16.msra.mxu0 0
  %1569 = vmatprep.subr.bf16.mxu0 0
  %1570 = vmatpush1.bf16.msra.mxu0 0
  %1571 = vmatprep.subr.bf16.mxu0 0
  %1572 = vmatpush1.bf16.msra.mxu0 0
  %1573 = vmatprep.subr.bf16.mxu0 0
  %1574 = vmatpush1.bf16.msra.mxu0 0
  %1575 = vmatprep.subr.bf16.mxu0 0
  %1576 = vmatpush1.bf16.msra.mxu0 0
  %1577 = vmatprep.subr.bf16.mxu0 0
  %1578 = vmatpush1.bf16.msra.mxu0 0
  %1579 = vmatprep.subr.bf16.mxu0 0
  %1580 = vmatpush1.bf16.msra.mxu0 0
  %1581 = vmatprep.subr.bf16.mxu0 0
  %1582 = vmatpush1.bf16.msra.mxu0 0
  %1583 = vmatprep.subr.bf16.mxu0 0
  %1584 = vmatpush1.bf16.msra.mxu0 0
  %1585 = vmatprep.subr.bf16.mxu0 0
  %1586 = vmatpush1.bf16.msra.mxu0 0
  %1587 = vmatprep.subr.bf16.mxu0 0
  %1588 = vmatpush1.bf16.msra.mxu0 0
  %1589 = vmatprep.subr.bf16.mxu0 0
  %1590 = vmatpush1.bf16.msra.mxu0 0
  %1591 = vmatprep.subr.bf16.mxu0 0
  %1592 = vmatpush1.bf16.msra.mxu0 0
  %1593 = vmatprep.subr.bf16.mxu0 0
  %1594 = vmatpush1.bf16.msra.mxu0 0
  %1595 = vmatprep.subr.bf16.mxu0 0
  %1596 = vmatpush1.bf16.msra.mxu0 0
  %1597 = vmatprep.mubr.bf16.mxu0 0
  %1598 = vmatmul.mubr.bf16.gmra.mrb[0].mxu0 %v1560
  %v1599 = vpop.f32.mrb[0].mxu0
  %v1600 = vadd.f32 0.0, %v1599
  %v1601 = vpop.f32.mrb[0].mxu0
  %v1602 = vpop.f32.mrb[0].mxu0
  %v1603 = vpop.f32.mrb[0].mxu0
  %1604 = vdwg.mxu0
  %v1605 = vadd.f32 %v1443, %v1600
  %1606 = vrot.lane.b32.xlu0 %v1128, 104
  %v1607 = vpop.permute.xlu0 %1606
  %v1609 = vrot.slane %v1130, 4
  %v1611 = vsel %vm120, %v1607, 0
  %v1614 = vsel %vm124, %v1609, 0
  %1616 = vmatprep.subr.bf16.mxu0 0
  %1617 = vmatpush1.bf16.msra.mxu0 %v1614
  %1618 = vmatprep.subr.bf16.mxu0 0
  %1619 = vmatpush1.bf16.msra.mxu0 0
  %1620 = vmatprep.subr.bf16.mxu0 0
  %1621 = vmatpush1.bf16.msra.mxu0 0
  %1622 = vmatprep.subr.bf16.mxu0 0
  %1623 = vmatpush1.bf16.msra.mxu0 0
  %1624 = vmatprep.subr.bf16.mxu0 0
  %1625 = vmatpush1.bf16.msra.mxu0 0
  %1626 = vmatprep.subr.bf16.mxu0 0
  %1627 = vmatpush1.bf16.msra.mxu0 0
  %1628 = vmatprep.subr.bf16.mxu0 0
  %1629 = vmatpush1.bf16.msra.mxu0 0
  %1630 = vmatprep.subr.bf16.mxu0 0
  %1631 = vmatpush1.bf16.msra.mxu0 0
  %1632 = vmatprep.subr.bf16.mxu0 0
  %1633 = vmatpush1.bf16.msra.mxu0 0
  %1634 = vmatprep.subr.bf16.mxu0 0
  %1635 = vmatpush1.bf16.msra.mxu0 0
  %1636 = vmatprep.subr.bf16.mxu0 0
  %1637 = vmatpush1.bf16.msra.mxu0 0
  %1638 = vmatprep.subr.bf16.mxu0 0
  %1639 = vmatpush1.bf16.msra.mxu0 0
  %1640 = vmatprep.subr.bf16.mxu0 0
  %1641 = vmatpush1.bf16.msra.mxu0 0
  %1642 = vmatprep.subr.bf16.mxu0 0
  %1643 = vmatpush1.bf16.msra.mxu0 0
  %1644 = vmatprep.subr.bf16.mxu0 0
  %1645 = vmatpush1.bf16.msra.mxu0 0
  %1646 = vmatprep.subr.bf16.mxu0 0
  %1647 = vmatpush1.bf16.msra.mxu0 0
  %1648 = vmatprep.mubr.bf16.mxu0 0
  %1649 = vmatmul.mubr.bf16.gmra.mrb[0].mxu0 %v1611
  %v1650 = vpop.f32.mrb[0].mxu0
  %v1651 = vadd.f32 0.0, %v1650
  %v1652 = vpop.f32.mrb[0].mxu0
  %v1653 = vpop.f32.mrb[0].mxu0
  %v1654 = vpop.f32.mrb[0].mxu0
  %1655 = vdwg.mxu0
  %v1656 = vsel %vm120, %v1651, -inf
  %1657 = vmax.xlane.f32.xlu0 %v1656
  %v1658 = vpop.xlane.xlu0 %1657
  %v1659 = vsub.f32 %v1651, %v1658
  %v1660 = vmul.f32 %v1659, 1.442695
  %v1661 = vpow.pop %v1660
  %v1662 = vsel %vm120, %v1661, 0.0
  %1663 = vadd.xlane.f32.xlu0 %v1662
  %v1664 = vpop.xlane.xlu0 %1663
  %v1665 = vrcp.pop %v1664
  %v1666 = vmul.f32 %v1661, %v1665
  %v1667 = vpack.c.bf16 %v1666, %v1666
  %1668 = vrot.lane.b32.xlu0 %v1131, 72
  %v1669 = vpop.permute.xlu0 %1668
  %v1671 = vsel %vm120, %v1667, 0
  %v1674 = vsel %vm124, %v1669, 0
  %1676 = vmatprep.subr.bf16.mxu0 0
  %1677 = vmatpush1.bf16.msra.mxu0 %v1674
  %1678 = vmatprep.subr.bf16.mxu0 0
  %1679 = vmatpush1.bf16.msra.mxu0 0
  %1680 = vmatprep.subr.bf16.mxu0 0
  %1681 = vmatpush1.bf16.msra.mxu0 0
  %1682 = vmatprep.subr.bf16.mxu0 0
  %1683 = vmatpush1.bf16.msra.mxu0 0
  %1684 = vmatprep.subr.bf16.mxu0 0
  %1685 = vmatpush1.bf16.msra.mxu0 0
  %1686 = vmatprep.subr.bf16.mxu0 0
  %1687 = vmatpush1.bf16.msra.mxu0 0
  %1688 = vmatprep.subr.bf16.mxu0 0
  %1689 = vmatpush1.bf16.msra.mxu0 0
  %1690 = vmatprep.subr.bf16.mxu0 0
  %1691 = vmatpush1.bf16.msra.mxu0 0
  %1692 = vmatprep.subr.bf16.mxu0 0
  %1693 = vmatpush1.bf16.msra.mxu0 0
  %1694 = vmatprep.subr.bf16.mxu0 0
  %1695 = vmatpush1.bf16.msra.mxu0 0
  %1696 = vmatprep.subr.bf16.mxu0 0
  %1697 = vmatpush1.bf16.msra.mxu0 0
  %1698 = vmatprep.subr.bf16.mxu0 0
  %1699 = vmatpush1.bf16.msra.mxu0 0
  %1700 = vmatprep.subr.bf16.mxu0 0
  %1701 = vmatpush1.bf16.msra.mxu0 0
  %1702 = vmatprep.subr.bf16.mxu0 0
  %1703 = vmatpush1.bf16.msra.mxu0 0
  %1704 = vmatprep.subr.bf16.mxu0 0
  %1705 = vmatpush1.bf16.msra.mxu0 0
  %1706 = vmatprep.subr.bf16.mxu0 0
  %1707 = vmatpush1.bf16.msra.mxu0 0
  %1708 = vmatprep.mubr.bf16.mxu0 0
  %1709 = vmatmul.mubr.bf16.gmra.mrb[0].mxu0 %v1671
  %v1710 = vpop.f32.mrb[0].mxu0
  %v1711 = vadd.f32 0.0, %v1710
  %v1712 = vpop.f32.mrb[0].mxu0
  %v1713 = vpop.f32.mrb[0].mxu0
  %v1714 = vpop.f32.mrb[0].mxu0
  %1715 = vdwg.mxu0
  %v1716 = vld [vmem:[%s1 + $0x98] sm:$0xff]
  %v1717 = vpack.c.bf16 %v1711, %v1711
  %v1718 = vpack.c.bf16 %v1716, %v1716
  %v1720 = vsel %vm120, %v1717, 0
  %v1723 = vsel %vm124, %v1718, 0
  %1725 = vmatprep.subr.bf16.mxu0 0
  %1726 = vmatpush1.bf16.msra.mxu0 %v1723
  %1727 = vmatprep.subr.bf16.mxu0 0
  %1728 = vmatpush1.bf16.msra.mxu0 0
  %1729 = vmatprep.subr.bf16.mxu0 0
  %1730 = vmatpush1.bf16.msra.mxu0 0
  %1731 = vmatprep.subr.bf16.mxu0 0
  %1732 = vmatpush1.bf16.msra.mxu0 0
  %1733 = vmatprep.subr.bf16.mxu0 0
  %1734 = vmatpush1.bf16.msra.mxu0 0
  %1735 = vmatprep.subr.bf16.mxu0 0
  %1736 = vmatpush1.bf16.msra.mxu0 0
  %1737 = vmatprep.subr.bf16.mxu0 0
  %1738 = vmatpush1.bf16.msra.mxu0 0
  %1739 = vmatprep.subr.bf16.mxu0 0
  %1740 = vmatpush1.bf16.msra.mxu0 0
  %1741 = vmatprep.subr.bf16.mxu0 0
  %1742 = vmatpush1.bf16.msra.mxu0 0
  %1743 = vmatprep.subr.bf16.mxu0 0
  %1744 = vmatpush1.bf16.msra.mxu0 0
  %1745 = vmatprep.subr.bf16.mxu0 0
  %1746 = vmatpush1.bf16.msra.mxu0 0
  %1747 = vmatprep.subr.bf16.mxu0 0
  %1748 = vmatpush1.bf16.msra.mxu0 0
  %1749 = vmatprep.subr.bf16.mxu0 0
  %1750 = vmatpush1.bf16.msra.mxu0 0
  %1751 = vmatprep.subr.bf16.mxu0 0
  %1752 = vmatpush1.bf16.msra.mxu0 0
  %1753 = vmatprep.subr.bf16.mxu0 0
  %1754 = vmatpush1.bf16.msra.mxu0 0
  %1755 = vmatprep.subr.bf16.mxu0 0
  %1756 = vmatpush1.bf16.msra.mxu0 0
  %1757 = vmatprep.mubr.bf16.mxu0 0
  %1758 = vmatmul.mubr.bf16.gmra.mrb[0].mxu0 %v1720
  %v1759 = vpop.f32.mrb[0].mxu0
  %v1760 = vadd.f32 0.0, %v1759
  %v1761 = vpop.f32.mrb[0].mxu0
  %v1762 = vpop.f32.mrb[0].mxu0
  %v1763 = vpop.f32.mrb[0].mxu0
  %1764 = vdwg.mxu0
  %v1765 = vadd.f32 %v1605, %v1760
  %v1766 = vld [vmem:[%s2 + $0x9] sm:$0x1]
  %v1767 = vlaneseq
  %v1768 = vshrl.u32 %v1767, 7
  %v1769 = vsub.s32 0, %v1768
  %v1770 = vrot.slane %v1766, %v1769
  %v1771 = vadd.f32 %v1765, %v1770
  %v1772 = vadd.f32 %v1771, %v930
  %v1773 = vsel %vm901, %v1772, 0.0
  %1774 = vadd.xlane.f32.xlu0 %v1773
  %v1775 = vpop.xlane.xlu0 %1774
  %v1776 = vmul.f32 %v1775, %v905
  %v1777 = vmul.f32 %v1772, %v1772
  %v1778 = vsel %vm901, %v1777, 0.0
  %1779 = vadd.xlane.f32.xlu0 %v1778
  %v1780 = vpop.xlane.xlu0 %1779
  %v1781 = vmul.f32 %v1780, %v905
  %v1782 = vmul.f32 %v1776, %v1776
  %v1783 = vsub.f32 %v1781, %v1782
  %v1784 = vsub.f32 %v1772, %v1776
  %v1785 = vadd.f32 %v1783, 1e-05
  %v1786 = vrsqrt.pop %v1785
  %v1787 = vmul.f32 %v1784, %v1786
  %v1788 = vld [vmem:[%s2 + $0xa] sm:$0x1]
  %v1789 = vld [vmem:[%s2 + $0xb] sm:$0x1]
  %v1790 = vlaneseq
  %v1791 = vshrl.u32 %v1790, 7
  %v1792 = vsub.s32 0, %v1791
  %v1793 = vrot.slane %v1788, %v1792
  %v1794 = vmul.f32 %v1787, %v1793
  %v1795 = vlaneseq
  %v1796 = vshrl.u32 %v1795, 7
  %v1797 = vsub.s32 0, %v1796
  %v1798 = vrot.slane %v1789, %v1797
  %v1799 = vadd.f32 %v1794, %v1798
  %v1800 = vmax.f32 %v1799, 0.0
  %v1801 = vld [vmem:[%s1 + $0xa0] sm:$0xff]
  %v1802 = vld [vmem:[%s1 + $0xa8] sm:$0xff]
  %v1803 = vld [vmem:[%s1 + $0xb0] sm:$0xff]
  %v1804 = vld [vmem:[%s1 + $0xb8] sm:$0xff]
  %v1805 = vpack.c.bf16 %v1800, %v1800
  %v1806 = vpack.c.bf16 %v1802, %v1801
  %v1807 = vpack.c.bf16 %v1804, %v1803
  %v1808 = vld [vmem:[%s2 + $0xc] sm:$0x1]
  %v1809 = vlaneseq
  %v1810 = vshrl.u32 %v1809, 7
  %v1811 = vsub.s32 0, %v1810
  %v1812 = vrot.slane %v1808, %v1811
  %v1814 = vsel %vm901, %v1805, 0
  %1816 = vmatprep.subr.bf16.mxu0 0
  %1817 = vmatpush1.bf16.msra.mxu0 %v1806
  %1818 = vmatprep.subr.bf16.mxu0 0
  %1819 = vmatpush1.bf16.msra.mxu0 %v1807
  %1820 = vmatprep.subr.bf16.mxu0 0
  %1821 = vmatpush1.bf16.msra.mxu0 0
  %1822 = vmatprep.subr.bf16.mxu0 0
  %1823 = vmatpush1.bf16.msra.mxu0 0
  %1824 = vmatprep.subr.bf16.mxu0 0
  %1825 = vmatpush1.bf16.msra.mxu0 0
  %1826 = vmatprep.subr.bf16.mxu0 0
  %1827 = vmatpush1.bf16.msra.mxu0 0
  %1828 = vmatprep.subr.bf16.mxu0 0
  %1829 = vmatpush1.bf16.msra.mxu0 0
  %1830 = vmatprep.subr.bf16.mxu0 0
  %1831 = vmatpush1.bf16.msra.mxu0 0
  %1832 = vmatprep.subr.bf16.mxu0 0
  %1833 = vmatpush1.bf16.msra.mxu0 0
  %1834 = vmatprep.subr.bf16.mxu0 0
  %1835 = vmatpush1.bf16.msra.mxu0 0
  %1836 = vmatprep.subr.bf16.mxu0 0
  %1837 = vmatpush1.bf16.msra.mxu0 0
  %1838 = vmatprep.subr.bf16.mxu0 0
  %1839 = vmatpush1.bf16.msra.mxu0 0
  %1840 = vmatprep.subr.bf16.mxu0 0
  %1841 = vmatpush1.bf16.msra.mxu0 0
  %1842 = vmatprep.subr.bf16.mxu0 0
  %1843 = vmatpush1.bf16.msra.mxu0 0
  %1844 = vmatprep.subr.bf16.mxu0 0
  %1845 = vmatpush1.bf16.msra.mxu0 0
  %1846 = vmatprep.subr.bf16.mxu0 0
  %1847 = vmatpush1.bf16.msra.mxu0 0
  %1848 = vmatprep.mubr.bf16.mxu0 0
  %1849 = vmatmul.mubr.bf16.gmra.mrb[0].mxu0 %v1814
  %v1850 = vpop.f32.mrb[0].mxu0
  %v1851 = vadd.f32 %v1812, %v1850
  %v1852 = vpop.f32.mrb[0].mxu0
  %v1853 = vpop.f32.mrb[0].mxu0
  %v1854 = vpop.f32.mrb[0].mxu0
  %1855 = vdwg.mxu0
  %vm1856 = vcmask 31744
  %v1857 = vsel %vm1856, %v1851, -inf
  %1858 = vmax.xlane.f32.xlu0 %v1857
  %v1859 = vpop.xlane.xlu0 %1858
  %v1860 = vsub.f32 %v1851, %v1859
  %v1861 = vmul.f32 %v1860, 1.442695
  %v1862 = vpow.pop %v1861
  %v1863 = vsel %vm1856, %v1862, 0.0
  %1864 = vadd.xlane.f32.xlu0 %v1863
  %v1865 = vpop.xlane.xlu0 %1864
  %v1866 = vlog2.pop %v1865
  %v1867 = vmul.f32 %v1866, 0.6931472
  %v1868 = vadd.f32 %v1867, %v1859
  %v1869 = vsub.f32 %v1851, %v1868
  %1870 = vst.msk [vmem:[%s3] sm:$0xff] %vm1856, %v1869
  // Predicated region
  $region14: #{tpu_custom_call.1} parent=0 // pred_check
    _
  $region15: #{tpu_custom_call.1} parent=0 // pred_check_branch
    %1872 = sbr.rel (0) target = $region17
  $region16: #{tpu_custom_call.1} parent=0 // pred_region
    _
  $region17: #{tpu_custom_call.1} parent=0 // pred_fallthru
    _
  // Predicated region
  $region18: #{tpu_custom_call.1} parent=0 // pred_check
    _
  $region19: #{tpu_custom_call.1} parent=0 // pred_check_branch
    %1874 = sbr.rel (0) target = $region21
  $region20: #{tpu_custom_call.1} parent=0 // pred_region
    _
  $region21: #{tpu_custom_call.1} parent=0 // pred_fallthru
    _

</llo_original>
